<compile_context>
chip_gen: v6e
topology: v6e:2x2x1
jax: 0.10.0
libtpu: 0.0.40
codegen_flags: <defaults>
</compile_context>

<pallas_src>
import functools
import math

import jax
import jax.numpy as jnp
from jax.experimental import pallas as pl
from jax.experimental.pallas import tpu as pltpu


# ----------------------------------------------------------------------------
# small helpers
# ----------------------------------------------------------------------------
def _round_up(x, m):
    return ((x + m - 1) // m) * m


def _pad2d(x, rows, cols):
    r, c = x.shape
    if r == rows and c == cols:
        return x
    return jnp.pad(x, ((0, rows - r), (0, cols - c)))


# ----------------------------------------------------------------------------
# RMSNorm kernel (CustomRMSNorm)
# ----------------------------------------------------------------------------
def _rmsnorm_kernel(x_ref, w_ref, o_ref, *, eps):
    # single f32 path; cast once at the store (exact match to torch for f32).
    x = x_ref[...].astype(jnp.float32)
    ms = jnp.mean(x * x, axis=-1, keepdims=True)
    inv = jax.lax.rsqrt(ms + eps)
    o_ref[...] = (w_ref[...].astype(jnp.float32) * (x * inv)).astype(o_ref.dtype)


def rmsnorm(x, weight, eps=1e-5):
    """weight * rmsnorm(x) over the last axis.  Output dtype = x.dtype."""
    orig_shape = x.shape
    dim = orig_shape[-1]
    x2d = x.reshape(-1, dim)
    rows = x2d.shape[0]
    itemsize = x2d.dtype.itemsize

    # Packed-sublane alignment: 16 rows for bf16, 8 rows for f32.
    sub = 16 if itemsize < 4 else 8
    # VMEM budget ~24 MiB for double-buffered in+out tiles (safe on v7x 64 MiB,
    # comfortably under the raised scoped limit on v5e/v6e).
    budget = 24 * 1024 * 1024
    max_rows = max(sub, budget // max(1, 4 * dim * itemsize))
    rows_tile = min(1024, max_rows, _round_up(rows, sub))
    rows_tile = max(sub, (rows_tile // sub) * sub)

    # cdiv-style grid via zero padding: no divisibility assert, big tiles stay
    # usable for arbitrary batch*seq.  Padded rows normalize to 0 and are sliced.
    rows_p = _round_up(rows, rows_tile)
    x_p = _pad2d(x2d, rows_p, dim)
    w2d = weight.reshape(1, dim)

    # NOTE: for production hidden sizes (>=128) the output block is lane-dense;
    # for the tiny demo dim the sub-128 lane folding trick is skipped because the
    # reduction is per-row over dim.
    out = pl.pallas_call(
        functools.partial(_rmsnorm_kernel, eps=eps),
        out_shape=jax.ShapeDtypeStruct((rows_p, dim), x.dtype),
        grid_spec=pltpu.PrefetchScalarGridSpec(
            num_scalar_prefetch=0,
            grid=(rows_p // rows_tile,),
            in_specs=[
                pl.BlockSpec((rows_tile, dim), lambda i: (i, 0)),
                pl.BlockSpec((1, dim), lambda i: (0, 0)),
            ],
            out_specs=pl.BlockSpec((rows_tile, dim), lambda i: (i, 0)),
        ),
        compiler_params=pltpu.CompilerParams(
            dimension_semantics=("parallel",),
            vmem_limit_bytes=48 * 1024 * 1024,  # raise scoped VMEM for big tiles
        ),
    )(x_p, w2d)
    return out[:rows].reshape(orig_shape)


# ----------------------------------------------------------------------------
# Tiled matmul kernel: y = x @ W^T  (nn.Linear, bias=False)
# ----------------------------------------------------------------------------
def _matmul_kernel(a_ref, b_ref, o_ref, acc_ref):
    @pl.when(pl.program_id(2) == 0)
    def _():
        acc_ref[...] = jnp.zeros_like(acc_ref)

    acc_ref[...] += jnp.dot(
        a_ref[...].astype(jnp.float32),
        b_ref[...].astype(jnp.float32),
        preferred_element_type=jnp.float32,
    )

    @pl.when(pl.program_id(2) == pl.num_programs(2) - 1)
    def _():
        o_ref[...] = acc_ref[...].astype(o_ref.dtype)


def linear(x2d, w, out_dtype=None):
    """x2d: (M, K), w: (N, K) nn.Linear weight -> (M, N)."""
    out_dtype = out_dtype or x2d.dtype
    M, K = x2d.shape
    N = w.shape[0]
    b = w.T  # (K, N)

    tm = _round_up(M, 8) if M <= 256 else 256
    tk = K if K <= 512 else 512
    tn = N if N <= 512 else 512
    Mp, Kp, Np = _round_up(M, tm), _round_up(K, tk), _round_up(N, tn)
    a_p = _pad2d(x2d, Mp, Kp)
    b_p = _pad2d(b, Kp, Np)

    out = pl.pallas_call(
        _matmul_kernel,
        out_shape=jax.ShapeDtypeStruct((Mp, Np), out_dtype),
        grid_spec=pltpu.PrefetchScalarGridSpec(
            num_scalar_prefetch=0,
            grid=(Mp // tm, Np // tn, Kp // tk),
            in_specs=[
                pl.BlockSpec((tm, tk), lambda i, j, k: (i, k)),
                pl.BlockSpec((tk, tn), lambda i, j, k: (k, j)),
            ],
            out_specs=pl.BlockSpec((tm, tn), lambda i, j, k: (i, j)),
            scratch_shapes=[pltpu.VMEM((tm, tn), jnp.float32)],
        ),
        compiler_params=pltpu.CompilerParams(
            dimension_semantics=("parallel", "parallel", "arbitrary"),
        ),
    )(a_p, b_p)
    return out[:M, :N]


# ----------------------------------------------------------------------------
# Fused DeepSeek expert kernel: down( SiLU(x Wg^T) * (x Wu^T) )
# ----------------------------------------------------------------------------
def _expert_kernel(x_ref, wg_ref, wu_ref, wd_ref, o_ref):
    x = x_ref[...].astype(jnp.float32)
    g = jnp.dot(x, wg_ref[...].astype(jnp.float32), preferred_element_type=jnp.float32)
    u = jnp.dot(x, wu_ref[...].astype(jnp.float32), preferred_element_type=jnp.float32)
    h = g * (1.0 / (1.0 + jnp.exp(-g))) * u  # SiLU(gate) * up
    o_ref[...] = jnp.dot(
        h, wd_ref[...].astype(jnp.float32), preferred_element_type=jnp.float32
    ).astype(o_ref.dtype)


def expert_mlp(x2d, w_gate, w_up, w_down):
    """w_gate/w_up: (I, H); w_down: (H, I) — nn.Linear layouts."""
    M, H = x2d.shape
    inter = w_gate.shape[0]
    tm = _round_up(M, 8) if M <= 256 else 256
    Mp = _round_up(M, tm)
    x_p = _pad2d(x2d, Mp, H)
    out = pl.pallas_call(
        _expert_kernel,
        out_shape=jax.ShapeDtypeStruct((Mp, H), x2d.dtype),
        grid_spec=pltpu.PrefetchScalarGridSpec(
            num_scalar_prefetch=0,
            grid=(Mp // tm,),
            in_specs=[
                pl.BlockSpec((tm, H), lambda i: (i, 0)),
                pl.BlockSpec((H, inter), lambda i: (0, 0)),
                pl.BlockSpec((H, inter), lambda i: (0, 0)),
                pl.BlockSpec((inter, H), lambda i: (0, 0)),
            ],
            out_specs=pl.BlockSpec((tm, H), lambda i: (i, 0)),
        ),
        compiler_params=pltpu.CompilerParams(dimension_semantics=("parallel",)),
    )(x_p, w_gate.T, w_up.T, w_down.T)
    return out[:M]


# ----------------------------------------------------------------------------
# Attention core kernel: softmax(q k^T / sqrt(dq)) v, no mask, eval mode
# ----------------------------------------------------------------------------
def _attn_kernel(q_ref, k_ref, v_ref, o_ref, *, scale):
    q = q_ref[...].astype(jnp.float32)  # (1, S, dqk)
    k = k_ref[...].astype(jnp.float32)  # (1, S, dqk)
    v = v_ref[...].astype(jnp.float32)  # (1, S, dv)
    s = jnp.einsum("bqd,bkd->bqk", q, k, preferred_element_type=jnp.float32) * scale
    s = s - jnp.max(s, axis=-1, keepdims=True)
    p = jnp.exp(s)
    o = jnp.einsum("bqk,bkd->bqd", p, v, preferred_element_type=jnp.float32)
    o_ref[...] = (o / jnp.sum(p, axis=-1, keepdims=True)).astype(o_ref.dtype)


def attention_core(q, k, v):
    """q,k: (B,H,S,dqk); v: (B,H,S,dv) -> (B,H,S,dv)."""
    B, H, S, dq = q.shape
    dv = v.shape[-1]
    scale = 1.0 / math.sqrt(dq)
    qf = q.reshape(B * H, S, dq)
    kf = k.reshape(B * H, S, dq)
    vf = v.reshape(B * H, S, dv)
    out = pl.pallas_call(
        functools.partial(_attn_kernel, scale=scale),
        out_shape=jax.ShapeDtypeStruct((B * H, S, dv), q.dtype),
        grid_spec=pltpu.PrefetchScalarGridSpec(
            num_scalar_prefetch=0,
            grid=(B * H,),
            in_specs=[
                pl.BlockSpec((1, S, dq), lambda i: (i, 0, 0)),
                pl.BlockSpec((1, S, dq), lambda i: (i, 0, 0)),
                pl.BlockSpec((1, S, dv), lambda i: (i, 0, 0)),
            ],
            out_specs=pl.BlockSpec((1, S, dv), lambda i: (i, 0, 0)),
        ),
        compiler_params=pltpu.CompilerParams(dimension_semantics=("parallel",)),
    )(qf, kf, vf)
    return out.reshape(B, H, S, dv)


# ----------------------------------------------------------------------------
# Rotary embedding (plain JAX glue — tiny elementwise work)
# ----------------------------------------------------------------------------
def rotate_half(x):
    half = x.shape[-1] // 2
    return jnp.concatenate([-x[..., half:], x[..., :half]], axis=-1)


def apply_rotary_pos_emb_single(x, cos, sin):
    return x * cos + rotate_half(x) * sin


def rotary_cos_sin(seq_len, dim, theta=10000.0, dtype=jnp.float32):
    inv_freq = 1.0 / theta ** (jnp.arange(0, dim, 2, dtype=jnp.float32) / dim)
    t = jnp.arange(seq_len, dtype=jnp.float32)
    freqs = jnp.einsum("i,j->ij", t, inv_freq)
    emb = jnp.concatenate([freqs, freqs], axis=-1)
    return (jnp.cos(emb)[None, None].astype(dtype),
            jnp.sin(emb)[None, None].astype(dtype))


# ----------------------------------------------------------------------------
# MultiHeadLatentAttention forward
# ----------------------------------------------------------------------------
def mla_attention(x, p, num_heads, rope_theta):
    B, S, Hdim = x.shape
    head_dim = Hdim // num_heads
    x2d = x.reshape(B * S, Hdim)

    kv_d = linear(x2d, p["kv_proj_d"])
    q_d = linear(x2d, p["q_proj_d"])
    k_proj = linear(kv_d, p["k_proj_u"])
    v = linear(kv_d, p["v_proj_u"])
    q_proj = linear(q_d, p["q_proj_u"])
    k_rope = linear(x2d, p["rope_k"])
    q_rope = linear(q_d, p["rope_q"])

    def heads(t):
        return t.reshape(B, S, num_heads, -1).transpose(0, 2, 1, 3)  # (B,H,S,*)

    k_proj, q_proj, k_rope, q_rope, v = map(heads, (k_proj, q_proj, k_rope, q_rope, v))

    cos, sin = rotary_cos_sin(S, head_dim, theta=rope_theta, dtype=x.dtype)
    k_rope = apply_rotary_pos_emb_single(k_rope, cos, sin)
    q_rope = apply_rotary_pos_emb_single(q_rope, cos, sin)

    k = jnp.concatenate([k_proj, k_rope], axis=-1)
    q = jnp.concatenate([q_proj, q_rope], axis=-1)

    attn = attention_core(q, k, v)  # (B,H,S,head_dim)
    attn = attn.transpose(0, 2, 1, 3).reshape(B * S, Hdim)
    return linear(attn, p["o_proj"]).reshape(B, S, Hdim)


# ----------------------------------------------------------------------------
# LlamaMLP (shared experts + top-k routed experts)
# ----------------------------------------------------------------------------
def moe_mlp(x, p, top_k):
    B, S, Hdim = x.shape
    x2d = x.reshape(B * S, Hdim)

    shared = None
    for ep in p["shared_experts"]:
        o = expert_mlp(x2d, ep["gate"], ep["up"], ep["down"])
        shared = o if shared is None else shared + o
    if len(p["shared_experts"]) > 1:
        shared = shared / len(p["shared_experts"])

    logits = linear(x2d, p["router"]) + p["routing_bias"]
    probs = jax.nn.softmax(logits.astype(jnp.float32), axis=-1)
    scores, indices = jax.lax.top_k(probs, top_k)
    scores = scores / jnp.sum(scores, axis=-1, keepdims=True)

    # TODO(synk): token routing (top-k gather/scatter) stays in plain JAX; dense
    # per-expert compute weighted by the routing mask is mathematically identical
    # to the torch masked loop for this forward pass.
    combined = jnp.zeros_like(x2d)
    for i, ep in enumerate(p["routed_experts"]):
        w_i = jnp.sum(jnp.where(indices == i, scores, 0.0), axis=-1)  # (B*S,)
        out_i = expert_mlp(x2d, ep["gate"], ep["up"], ep["down"])
        combined = combined + w_i[:, None].astype(x2d.dtype) * out_i

    return (shared + combined).reshape(B, S, Hdim)


# ----------------------------------------------------------------------------
# DecoderLayer forward
# ----------------------------------------------------------------------------
def decoder_layer(x, params, config):
    # TODO(synk): attn/mlp Dropout(0.15) and SDPA dropout_p=0.1 are stochastic;
    # implemented here as inference-mode identities.
    residual = x
    h = rmsnorm(x, params["input_norm"], eps=config["rms_norm_eps"])
    attn = mla_attention(h, params["attn"], config["num_attention_heads"],
                         config["rope_theta"])
    x = residual + attn

    residual = x
    h = rmsnorm(x, params["post_attn_norm"], eps=config["rms_norm_eps"])
    mlp = moe_mlp(h, params["mlp"], config["top_k_experts"])
    return residual + mlp


# ----------------------------------------------------------------------------
# Pure-JAX reference (mirrors the torch forward in eval mode)
# ----------------------------------------------------------------------------
def decoder_layer_ref(x, params, config):
    eps = config["rms_norm_eps"]
    H = config["num_attention_heads"]
    Hdim = config["hidden_size"]
    head_dim = Hdim // H
    HI = jax.lax.Precision.HIGHEST

    def lin(t, w):
        return jnp.dot(t, w.T, precision=HI)

    def norm(t, w):
        tf = t.astype(jnp.float32)
        n = tf * jax.lax.rsqrt(jnp.mean(tf * tf, axis=-1, keepdims=True) + eps)
        return (w * n.astype(t.dtype)).astype(t.dtype)

    def expert(t, ep):
        g = lin(t, ep["gate"])
        u = lin(t, ep["up"])
        return lin(g * (1.0 / (1.0 + jnp.exp(-g))) * u, ep["down"])

    B, S, _ = x.shape
    residual = x
    h = norm(x, params["input_norm"])
    h2 = h.reshape(B * S, Hdim)
    ap = params["attn"]
    kv_d, q_d = lin(h2, ap["kv_proj_d"]), lin(h2, ap["q_proj_d"])
    k_proj, v = lin(kv_d, ap["k_proj_u"]), lin(kv_d, ap["v_proj_u"])
    q_proj = lin(q_d, ap["q_proj_u"])
    k_rope, q_rope = lin(h2, ap["rope_k"]), lin(q_d, ap["rope_q"])

    def heads(t):
        return t.reshape(B, S, H, -1).transpose(0, 2, 1, 3)

    k_proj, q_proj, k_rope, q_rope, v = map(heads, (k_proj, q_proj, k_rope, q_rope, v))
    cos, sin = rotary_cos_sin(S, head_dim, theta=config["rope_theta"])
    k_rope = apply_rotary_pos_emb_single(k_rope, cos, sin)
    q_rope = apply_rotary_pos_emb_single(q_rope, cos, sin)
    k = jnp.concatenate([k_proj, k_rope], axis=-1)
    q = jnp.concatenate([q_proj, q_rope], axis=-1)
    scale = 1.0 / math.sqrt(q.shape[-1])
    s = jnp.einsum("bhqd,bhkd->bhqk", q, k, precision=HI) * scale
    p = jax.nn.softmax(s, axis=-1)
    attn = jnp.einsum("bhqk,bhkd->bhqd", p, v, precision=HI)
    attn = attn.transpose(0, 2, 1, 3).reshape(B * S, Hdim)
    x = residual + lin(attn, ap["o_proj"]).reshape(B, S, Hdim)

    residual = x
    h = norm(x, params["post_attn_norm"])
    h2 = h.reshape(B * S, Hdim)
    mp = params["mlp"]
    shared = sum(expert(h2, ep) for ep in mp["shared_experts"])
    if len(mp["shared_experts"]) > 1:
        shared = shared / len(mp["shared_experts"])
    logits = lin(h2, mp["router"]) + mp["routing_bias"]
    probs = jax.nn.softmax(logits, axis=-1)
    scores, indices = jax.lax.top_k(probs, config["top_k_experts"])
    scores = scores / jnp.sum(scores, axis=-1, keepdims=True)
    combined = jnp.zeros_like(h2)
    for i, ep in enumerate(mp["routed_experts"]):
        w_i = jnp.sum(jnp.where(indices == i, scores, 0.0), axis=-1)
        combined = combined + w_i[:, None] * expert(h2, ep)
    return residual + (shared + combined).reshape(B, S, Hdim)


# ----------------------------------------------------------------------------
# Deterministic params + demo
# ----------------------------------------------------------------------------
def init_params(key, config):
    Hdim = config["hidden_size"]
    inter = config["intermediate_size"]
    latent = Hdim // 4  # compression_ratio = 4
    n_routed = config["num_experts"] - config["num_shared_experts"]
    ks = iter(jax.random.split(key, 64))

    def w(shape, std=0.02):
        return (std * jax.random.normal(next(ks), shape)).astype(jnp.float32)

    def expert_p():
        return {"gate": w((inter, Hdim), 0.05),
                "up": w((inter, Hdim), 0.05),
                "down": w((Hdim, inter), 0.05)}

    return {
        "input_norm": jnp.ones((Hdim,), jnp.float32),
        "post_attn_norm": jnp.ones((Hdim,), jnp.float32),
        "attn": {
            "kv_proj_d": w((latent, Hdim)),
            "q_proj_d": w((latent, Hdim)),
            "k_proj_u": w((Hdim // 2, latent)),
            "v_proj_u": w((Hdim, latent)),
            "q_proj_u": w((Hdim // 2, latent)),
            "rope_k": w((Hdim // 2, Hdim)),
            "rope_q": w((Hdim // 2, latent)),
            "o_proj": w((Hdim, Hdim)),
        },
        "mlp": {
            "shared_experts": [expert_p() for _ in range(config["num_shared_experts"])],
            "routed_experts": [expert_p() for _ in range(n_routed)],
            "router": w((n_routed, Hdim)),
            "routing_bias": jnp.zeros((n_routed,), jnp.float32),
        },
    }


if __name__ == "__main__":
    config = dict(
        hidden_size=32,
        num_attention_heads=16,   # head_dim = 2 (see note at top)
        intermediate_size=64,
        num_experts=4,
        num_shared_experts=1,
        top_k_experts=2,
        rms_norm_eps=1e-5,
        rope_theta=10000.0,
    )
    batch, seq = 2, 8

    key = jax.random.PRNGKey(0)
    kx, kp = jax.random.split(key)
    x = jax.random.normal(kx, (batch, seq, config["hidden_size"]), dtype=jnp.float32)
    params = init_params(kp, config)

    fwd = jax.jit(functools.partial(decoder_layer, config=config))
    out = jax.block_until_ready(fwd(x, params))

    ref = jax.block_until_ready(decoder_layer_ref(x, params, config))
    assert out.shape == x.shape
    max_err = float(jnp.max(jnp.abs(out - ref)))
    assert jnp.allclose(out, ref, atol=2e-3, rtol=2e-3), f"max abs err {max_err}"
    print("KERNEL_OK")
</pallas_src>

<mosaic_0001>
module attributes {stable_mosaic.version = 11 : i64} {
  func.func @_rmsnorm_kernel(%arg0: i32, %arg1: memref<16x32xf32, #tpu.memory_space<vmem>>, %arg2: memref<1x32xf32, #tpu.memory_space<vmem>>, %arg3: memref<16x32xf32, #tpu.memory_space<vmem>>) attributes {dimension_semantics = [#tpu.dimension_semantics<parallel>], iteration_bounds = array<i64: 1>, scalar_prefetch = 0 : i64, scratch_operands = 0 : i64, tpu.core_type = #tpu.core_type<tc>, window_params = [{transform_indices = @transform_0, window_bounds = array<i64: 16, 32>}, {pipeline_mode = #tpu.pipeline_mode<synchronous>, transform_indices = @transform_1, window_bounds = array<i64: 1, 32>}, {transform_indices = @transform_2, window_bounds = array<i64: 16, 32>}]} {
    %c0 = arith.constant 0 : index
    %c0_0 = arith.constant 0 : index
    %0 = vector.load %arg1[%c0, %c0_0] : memref<16x32xf32, #tpu.memory_space<vmem>>, vector<16x32xf32>
    %1 = arith.mulf %0, %0 : vector<16x32xf32>
    %cst = arith.constant dense<0.000000e+00> : vector<16xf32>
    %2 = vector.multi_reduction <add>, %1, %cst [1] : vector<16x32xf32> to vector<16xf32>
    %3 = vector.shape_cast %2 : vector<16xf32> to vector<16x1xf32>
    %cst_1 = arith.constant 3.200000e+01 : f32
    %4 = vector.broadcast %cst_1 : f32 to vector<16x1xf32>
    %5 = arith.divf %3, %4 : vector<16x1xf32>
    %cst_2 = arith.constant 9.99999974E-6 : f32
    %6 = vector.broadcast %cst_2 : f32 to vector<16x1xf32>
    %7 = arith.addf %5, %6 : vector<16x1xf32>
    %8 = math.rsqrt %7 : vector<16x1xf32>
    %c0_3 = arith.constant 0 : index
    %c0_4 = arith.constant 0 : index
    %9 = vector.load %arg2[%c0_3, %c0_4] : memref<1x32xf32, #tpu.memory_space<vmem>>, vector<1x32xf32>
    %10 = vector.broadcast %8 : vector<16x1xf32> to vector<16x32xf32>
    %11 = arith.mulf %0, %10 : vector<16x32xf32>
    %12 = vector.broadcast %9 : vector<1x32xf32> to vector<16x32xf32>
    %13 = arith.mulf %12, %11 : vector<16x32xf32>
    %c0_5 = arith.constant 0 : index
    %c0_6 = arith.constant 0 : index
    %14 = vector.load %arg3[%c0_5, %c0_6] : memref<16x32xf32, #tpu.memory_space<vmem>>, vector<16x32xf32>
    tpu.vector_store %arg3[%c0_5, %c0_6], %13 {strides = array<i32>} : memref<16x32xf32, #tpu.memory_space<vmem>>, vector<16x32xf32>,
    return
  }
  func.func @transform_0(%arg0: i32) -> (i32, i32) {
    %c0_i32 = arith.constant 0 : i32
    %c0_i32_0 = arith.constant 0 : i32
    return %arg0, %c0_i32 : i32, i32
  }
  func.func @transform_1(%arg0: i32) -> (i32, i32) {
    %c0_i32 = arith.constant 0 : i32
    %c0_i32_0 = arith.constant 0 : i32
    %c0_i32_1 = arith.constant 0 : i32
    return %c0_i32, %c0_i32_0 : i32, i32
  }
  func.func @transform_2(%arg0: i32) -> (i32, i32) {
    %c0_i32 = arith.constant 0 : i32
    %c0_i32_0 = arith.constant 0 : i32
    return %arg0, %c0_i32 : i32, i32
  }
}

module attributes {stable_mosaic.version = 11 : i64} {
  func.func @_matmul_kernel(%arg0: i32, %arg1: i32, %arg2: i32, %arg3: memref<16x32xf32, #tpu.memory_space<vmem>>, %arg4: memref<32x8xf32, #tpu.memory_space<vmem>>, %arg5: memref<16x8xf32, #tpu.memory_space<vmem>>, %arg6: memref<16x8xf32, #tpu.memory_space<vmem>>) attributes {dimension_semantics = [#tpu.dimension_semantics<parallel>, #tpu.dimension_semantics<parallel>, #tpu.dimension_semantics<arbitrary>], iteration_bounds = array<i64: 1, 1, 1>, scalar_prefetch = 0 : i64, scratch_operands = 1 : i64, tpu.core_type = #tpu.core_type<tc>, window_params = [{transform_indices = @transform_0, window_bounds = array<i64: 16, 32>}, {transform_indices = @transform_1, window_bounds = array<i64: 32, 8>}, {transform_indices = @transform_2, window_bounds = array<i64: 16, 8>}]} {
    %c0_i32 = arith.constant 0 : i32
    %0 = arith.cmpi eq, %arg2, %c0_i32 : i32
    %1 = arith.extui %0 : i1 to i32
    %c0_i32_0 = arith.constant 0 : i32
    %2 = arith.cmpi ne, %1, %c0_i32_0 : i32
    scf.if %2 {
      %cst_10 = arith.constant 0.000000e+00 : f32
      %12 = vector.broadcast %cst_10 : f32 to vector<16x8xf32>
      %c0_11 = arith.constant 0 : index
      %c0_12 = arith.constant 0 : index
      %13 = vector.load %arg6[%c0_11, %c0_12] : memref<16x8xf32, #tpu.memory_space<vmem>>, vector<16x8xf32>
      tpu.vector_store %arg6[%c0_11, %c0_12], %12 {strides = array<i32>} : memref<16x8xf32, #tpu.memory_space<vmem>>, vector<16x8xf32>,
    } else {
    }
    %c0 = arith.constant 0 : index
    %c0_1 = arith.constant 0 : index
    %3 = vector.load %arg6[%c0, %c0_1] : memref<16x8xf32, #tpu.memory_space<vmem>>, vector<16x8xf32>
    %c0_2 = arith.constant 0 : index
    %c0_3 = arith.constant 0 : index
    %4 = vector.load %arg3[%c0_2, %c0_3] : memref<16x32xf32, #tpu.memory_space<vmem>>, vector<16x32xf32>
    %c0_4 = arith.constant 0 : index
    %c0_5 = arith.constant 0 : index
    %5 = vector.load %arg4[%c0_4, %c0_5] : memref<32x8xf32, #tpu.memory_space<vmem>>, vector<32x8xf32>
    %cst = arith.constant dense<0.000000e+00> : vector<16x8xf32>
    %6 = tpu.matmul %4, %5, %cst {dimension_numbers = #tpu.dot_dimension_numbers<[1], [0], [0], [1], [0, 0, 1, 1], [], []>} : vector<16x32xf32>, vector<32x8xf32>, vector<16x8xf32> -> vector<16x8xf32>
    %7 = arith.addf %3, %6 : vector<16x8xf32>
    %c0_6 = arith.constant 0 : index
    %c0_7 = arith.constant 0 : index
    %8 = vector.load %arg6[%c0_6, %c0_7] : memref<16x8xf32, #tpu.memory_space<vmem>>, vector<16x8xf32>
    tpu.vector_store %arg6[%c0_6, %c0_7], %7 {strides = array<i32>} : memref<16x8xf32, #tpu.memory_space<vmem>>, vector<16x8xf32>,
    %c0_i32_8 = arith.constant 0 : i32
    %9 = arith.cmpi eq, %arg2, %c0_i32_8 : i32
    %10 = arith.extui %9 : i1 to i32
    %c0_i32_9 = arith.constant 0 : i32
    %11 = arith.cmpi ne, %10, %c0_i32_9 : i32
    scf.if %11 {
      %c0_10 = arith.constant 0 : index
      %c0_11 = arith.constant 0 : index
      %12 = vector.load %arg6[%c0_10, %c0_11] : memref<16x8xf32, #tpu.memory_space<vmem>>, vector<16x8xf32>
      %c0_12 = arith.constant 0 : index
      %c0_13 = arith.constant 0 : index
      %13 = vector.load %arg5[%c0_12, %c0_13] : memref<16x8xf32, #tpu.memory_space<vmem>>, vector<16x8xf32>
      tpu.vector_store %arg5[%c0_12, %c0_13], %12 {strides = array<i32>} : memref<16x8xf32, #tpu.memory_space<vmem>>, vector<16x8xf32>,
    } else {
    }
    return
  }
  func.func @transform_0(%arg0: i32, %arg1: i32, %arg2: i32) -> (i32, i32) {
    %c0_i32 = arith.constant 0 : i32
    return %arg0, %arg2 : i32, i32
  }
  func.func @transform_1(%arg0: i32, %arg1: i32, %arg2: i32) -> (i32, i32) {
    %c0_i32 = arith.constant 0 : i32
    return %arg2, %arg1 : i32, i32
  }
  func.func @transform_2(%arg0: i32, %arg1: i32, %arg2: i32) -> (i32, i32) {
    %c0_i32 = arith.constant 0 : i32
    return %arg0, %arg1 : i32, i32
  }
}

module attributes {stable_mosaic.version = 11 : i64} {
  func.func @_matmul_kernel(%arg0: i32, %arg1: i32, %arg2: i32, %arg3: memref<16x8xf32, #tpu.memory_space<vmem>>, %arg4: memref<8x16xf32, #tpu.memory_space<vmem>>, %arg5: memref<16x16xf32, #tpu.memory_space<vmem>>, %arg6: memref<16x16xf32, #tpu.memory_space<vmem>>) attributes {dimension_semantics = [#tpu.dimension_semantics<parallel>, #tpu.dimension_semantics<parallel>, #tpu.dimension_semantics<arbitrary>], iteration_bounds = array<i64: 1, 1, 1>, scalar_prefetch = 0 : i64, scratch_operands = 1 : i64, tpu.core_type = #tpu.core_type<tc>, window_params = [{transform_indices = @transform_0, window_bounds = array<i64: 16, 8>}, {transform_indices = @transform_1, window_bounds = array<i64: 8, 16>}, {transform_indices = @transform_2, window_bounds = array<i64: 16, 16>}]} {
    %c0_i32 = arith.constant 0 : i32
    %0 = arith.cmpi eq, %arg2, %c0_i32 : i32
    %1 = arith.extui %0 : i1 to i32
    %c0_i32_0 = arith.constant 0 : i32
    %2 = arith.cmpi ne, %1, %c0_i32_0 : i32
    scf.if %2 {
      %cst_10 = arith.constant 0.000000e+00 : f32
      %12 = vector.broadcast %cst_10 : f32 to vector<16x16xf32>
      %c0_11 = arith.constant 0 : index
      %c0_12 = arith.constant 0 : index
      %13 = vector.load %arg6[%c0_11, %c0_12] : memref<16x16xf32, #tpu.memory_space<vmem>>, vector<16x16xf32>
      tpu.vector_store %arg6[%c0_11, %c0_12], %12 {strides = array<i32>} : memref<16x16xf32, #tpu.memory_space<vmem>>, vector<16x16xf32>,
    } else {
    }
    %c0 = arith.constant 0 : index
    %c0_1 = arith.constant 0 : index
    %3 = vector.load %arg6[%c0, %c0_1] : memref<16x16xf32, #tpu.memory_space<vmem>>, vector<16x16xf32>
    %c0_2 = arith.constant 0 : index
    %c0_3 = arith.constant 0 : index
    %4 = vector.load %arg3[%c0_2, %c0_3] : memref<16x8xf32, #tpu.memory_space<vmem>>, vector<16x8xf32>
    %c0_4 = arith.constant 0 : index
    %c0_5 = arith.constant 0 : index
    %5 = vector.load %arg4[%c0_4, %c0_5] : memref<8x16xf32, #tpu.memory_space<vmem>>, vector<8x16xf32>
    %cst = arith.constant dense<0.000000e+00> : vector<16x16xf32>
    %6 = tpu.matmul %4, %5, %cst {dimension_numbers = #tpu.dot_dimension_numbers<[1], [0], [0], [1], [0, 0, 1, 1], [], []>} : vector<16x8xf32>, vector<8x16xf32>, vector<16x16xf32> -> vector<16x16xf32>
    %7 = arith.addf %3, %6 : vector<16x16xf32>
    %c0_6 = arith.constant 0 : index
    %c0_7 = arith.constant 0 : index
    %8 = vector.load %arg6[%c0_6, %c0_7] : memref<16x16xf32, #tpu.memory_space<vmem>>, vector<16x16xf32>
    tpu.vector_store %arg6[%c0_6, %c0_7], %7 {strides = array<i32>} : memref<16x16xf32, #tpu.memory_space<vmem>>, vector<16x16xf32>,
    %c0_i32_8 = arith.constant 0 : i32
    %9 = arith.cmpi eq, %arg2, %c0_i32_8 : i32
    %10 = arith.extui %9 : i1 to i32
    %c0_i32_9 = arith.constant 0 : i32
    %11 = arith.cmpi ne, %10, %c0_i32_9 : i32
    scf.if %11 {
      %c0_10 = arith.constant 0 : index
      %c0_11 = arith.constant 0 : index
      %12 = vector.load %arg6[%c0_10, %c0_11] : memref<16x16xf32, #tpu.memory_space<vmem>>, vector<16x16xf32>
      %c0_12 = arith.constant 0 : index
      %c0_13 = arith.constant 0 : index
      %13 = vector.load %arg5[%c0_12, %c0_13] : memref<16x16xf32, #tpu.memory_space<vmem>>, vector<16x16xf32>
      tpu.vector_store %arg5[%c0_12, %c0_13], %12 {strides = array<i32>} : memref<16x16xf32, #tpu.memory_space<vmem>>, vector<16x16xf32>,
    } else {
    }
    return
  }
  func.func @transform_0(%arg0: i32, %arg1: i32, %arg2: i32) -> (i32, i32) {
    %c0_i32 = arith.constant 0 : i32
    return %arg0, %arg2 : i32, i32
  }
  func.func @transform_1(%arg0: i32, %arg1: i32, %arg2: i32) -> (i32, i32) {
    %c0_i32 = arith.constant 0 : i32
    return %arg2, %arg1 : i32, i32
  }
  func.func @transform_2(%arg0: i32, %arg1: i32, %arg2: i32) -> (i32, i32) {
    %c0_i32 = arith.constant 0 : i32
    return %arg0, %arg1 : i32, i32
  }
}

module attributes {stable_mosaic.version = 11 : i64} {
  func.func @_matmul_kernel(%arg0: i32, %arg1: i32, %arg2: i32, %arg3: memref<16x8xf32, #tpu.memory_space<vmem>>, %arg4: memref<8x32xf32, #tpu.memory_space<vmem>>, %arg5: memref<16x32xf32, #tpu.memory_space<vmem>>, %arg6: memref<16x32xf32, #tpu.memory_space<vmem>>) attributes {dimension_semantics = [#tpu.dimension_semantics<parallel>, #tpu.dimension_semantics<parallel>, #tpu.dimension_semantics<arbitrary>], iteration_bounds = array<i64: 1, 1, 1>, scalar_prefetch = 0 : i64, scratch_operands = 1 : i64, tpu.core_type = #tpu.core_type<tc>, window_params = [{transform_indices = @transform_0, window_bounds = array<i64: 16, 8>}, {transform_indices = @transform_1, window_bounds = array<i64: 8, 32>}, {transform_indices = @transform_2, window_bounds = array<i64: 16, 32>}]} {
    %c0_i32 = arith.constant 0 : i32
    %0 = arith.cmpi eq, %arg2, %c0_i32 : i32
    %1 = arith.extui %0 : i1 to i32
    %c0_i32_0 = arith.constant 0 : i32
    %2 = arith.cmpi ne, %1, %c0_i32_0 : i32
    scf.if %2 {
      %cst_10 = arith.constant 0.000000e+00 : f32
      %12 = vector.broadcast %cst_10 : f32 to vector<16x32xf32>
      %c0_11 = arith.constant 0 : index
      %c0_12 = arith.constant 0 : index
      %13 = vector.load %arg6[%c0_11, %c0_12] : memref<16x32xf32, #tpu.memory_space<vmem>>, vector<16x32xf32>
      tpu.vector_store %arg6[%c0_11, %c0_12], %12 {strides = array<i32>} : memref<16x32xf32, #tpu.memory_space<vmem>>, vector<16x32xf32>,
    } else {
    }
    %c0 = arith.constant 0 : index
    %c0_1 = arith.constant 0 : index
    %3 = vector.load %arg6[%c0, %c0_1] : memref<16x32xf32, #tpu.memory_space<vmem>>, vector<16x32xf32>
    %c0_2 = arith.constant 0 : index
    %c0_3 = arith.constant 0 : index
    %4 = vector.load %arg3[%c0_2, %c0_3] : memref<16x8xf32, #tpu.memory_space<vmem>>, vector<16x8xf32>
    %c0_4 = arith.constant 0 : index
    %c0_5 = arith.constant 0 : index
    %5 = vector.load %arg4[%c0_4, %c0_5] : memref<8x32xf32, #tpu.memory_space<vmem>>, vector<8x32xf32>
    %cst = arith.constant dense<0.000000e+00> : vector<16x32xf32>
    %6 = tpu.matmul %4, %5, %cst {dimension_numbers = #tpu.dot_dimension_numbers<[1], [0], [0], [1], [0, 0, 1, 1], [], []>} : vector<16x8xf32>, vector<8x32xf32>, vector<16x32xf32> -> vector<16x32xf32>
    %7 = arith.addf %3, %6 : vector<16x32xf32>
    %c0_6 = arith.constant 0 : index
    %c0_7 = arith.constant 0 : index
    %8 = vector.load %arg6[%c0_6, %c0_7] : memref<16x32xf32, #tpu.memory_space<vmem>>, vector<16x32xf32>
    tpu.vector_store %arg6[%c0_6, %c0_7], %7 {strides = array<i32>} : memref<16x32xf32, #tpu.memory_space<vmem>>, vector<16x32xf32>,
    %c0_i32_8 = arith.constant 0 : i32
    %9 = arith.cmpi eq, %arg2, %c0_i32_8 : i32
    %10 = arith.extui %9 : i1 to i32
    %c0_i32_9 = arith.constant 0 : i32
    %11 = arith.cmpi ne, %10, %c0_i32_9 : i32
    scf.if %11 {
      %c0_10 = arith.constant 0 : index
      %c0_11 = arith.constant 0 : index
      %12 = vector.load %arg6[%c0_10, %c0_11] : memref<16x32xf32, #tpu.memory_space<vmem>>, vector<16x32xf32>
      %c0_12 = arith.constant 0 : index
      %c0_13 = arith.constant 0 : index
      %13 = vector.load %arg5[%c0_12, %c0_13] : memref<16x32xf32, #tpu.memory_space<vmem>>, vector<16x32xf32>
      tpu.vector_store %arg5[%c0_12, %c0_13], %12 {strides = array<i32>} : memref<16x32xf32, #tpu.memory_space<vmem>>, vector<16x32xf32>,
    } else {
    }
    return
  }
  func.func @transform_0(%arg0: i32, %arg1: i32, %arg2: i32) -> (i32, i32) {
    %c0_i32 = arith.constant 0 : i32
    return %arg0, %arg2 : i32, i32
  }
  func.func @transform_1(%arg0: i32, %arg1: i32, %arg2: i32) -> (i32, i32) {
    %c0_i32 = arith.constant 0 : i32
    return %arg2, %arg1 : i32, i32
  }
  func.func @transform_2(%arg0: i32, %arg1: i32, %arg2: i32) -> (i32, i32) {
    %c0_i32 = arith.constant 0 : i32
    return %arg0, %arg1 : i32, i32
  }
}

module attributes {stable_mosaic.version = 11 : i64} {
  func.func @_matmul_kernel(%arg0: i32, %arg1: i32, %arg2: i32, %arg3: memref<16x32xf32, #tpu.memory_space<vmem>>, %arg4: memref<32x16xf32, #tpu.memory_space<vmem>>, %arg5: memref<16x16xf32, #tpu.memory_space<vmem>>, %arg6: memref<16x16xf32, #tpu.memory_space<vmem>>) attributes {dimension_semantics = [#tpu.dimension_semantics<parallel>, #tpu.dimension_semantics<parallel>, #tpu.dimension_semantics<arbitrary>], iteration_bounds = array<i64: 1, 1, 1>, scalar_prefetch = 0 : i64, scratch_operands = 1 : i64, tpu.core_type = #tpu.core_type<tc>, window_params = [{transform_indices = @transform_0, window_bounds = array<i64: 16, 32>}, {transform_indices = @transform_1, window_bounds = array<i64: 32, 16>}, {transform_indices = @transform_2, window_bounds = array<i64: 16, 16>}]} {
    %c0_i32 = arith.constant 0 : i32
    %0 = arith.cmpi eq, %arg2, %c0_i32 : i32
    %1 = arith.extui %0 : i1 to i32
    %c0_i32_0 = arith.constant 0 : i32
    %2 = arith.cmpi ne, %1, %c0_i32_0 : i32
    scf.if %2 {
      %cst_10 = arith.constant 0.000000e+00 : f32
      %12 = vector.broadcast %cst_10 : f32 to vector<16x16xf32>
      %c0_11 = arith.constant 0 : index
      %c0_12 = arith.constant 0 : index
      %13 = vector.load %arg6[%c0_11, %c0_12] : memref<16x16xf32, #tpu.memory_space<vmem>>, vector<16x16xf32>
      tpu.vector_store %arg6[%c0_11, %c0_12], %12 {strides = array<i32>} : memref<16x16xf32, #tpu.memory_space<vmem>>, vector<16x16xf32>,
    } else {
    }
    %c0 = arith.constant 0 : index
    %c0_1 = arith.constant 0 : index
    %3 = vector.load %arg6[%c0, %c0_1] : memref<16x16xf32, #tpu.memory_space<vmem>>, vector<16x16xf32>
    %c0_2 = arith.constant 0 : index
    %c0_3 = arith.constant 0 : index
    %4 = vector.load %arg3[%c0_2, %c0_3] : memref<16x32xf32, #tpu.memory_space<vmem>>, vector<16x32xf32>
    %c0_4 = arith.constant 0 : index
    %c0_5 = arith.constant 0 : index
    %5 = vector.load %arg4[%c0_4, %c0_5] : memref<32x16xf32, #tpu.memory_space<vmem>>, vector<32x16xf32>
    %cst = arith.constant dense<0.000000e+00> : vector<16x16xf32>
    %6 = tpu.matmul %4, %5, %cst {dimension_numbers = #tpu.dot_dimension_numbers<[1], [0], [0], [1], [0, 0, 1, 1], [], []>} : vector<16x32xf32>, vector<32x16xf32>, vector<16x16xf32> -> vector<16x16xf32>
    %7 = arith.addf %3, %6 : vector<16x16xf32>
    %c0_6 = arith.constant 0 : index
    %c0_7 = arith.constant 0 : index
    %8 = vector.load %arg6[%c0_6, %c0_7] : memref<16x16xf32, #tpu.memory_space<vmem>>, vector<16x16xf32>
    tpu.vector_store %arg6[%c0_6, %c0_7], %7 {strides = array<i32>} : memref<16x16xf32, #tpu.memory_space<vmem>>, vector<16x16xf32>,
    %c0_i32_8 = arith.constant 0 : i32
    %9 = arith.cmpi eq, %arg2, %c0_i32_8 : i32
    %10 = arith.extui %9 : i1 to i32
    %c0_i32_9 = arith.constant 0 : i32
    %11 = arith.cmpi ne, %10, %c0_i32_9 : i32
    scf.if %11 {
      %c0_10 = arith.constant 0 : index
      %c0_11 = arith.constant 0 : index
      %12 = vector.load %arg6[%c0_10, %c0_11] : memref<16x16xf32, #tpu.memory_space<vmem>>, vector<16x16xf32>
      %c0_12 = arith.constant 0 : index
      %c0_13 = arith.constant 0 : index
      %13 = vector.load %arg5[%c0_12, %c0_13] : memref<16x16xf32, #tpu.memory_space<vmem>>, vector<16x16xf32>
      tpu.vector_store %arg5[%c0_12, %c0_13], %12 {strides = array<i32>} : memref<16x16xf32, #tpu.memory_space<vmem>>, vector<16x16xf32>,
    } else {
    }
    return
  }
  func.func @transform_0(%arg0: i32, %arg1: i32, %arg2: i32) -> (i32, i32) {
    %c0_i32 = arith.constant 0 : i32
    return %arg0, %arg2 : i32, i32
  }
  func.func @transform_1(%arg0: i32, %arg1: i32, %arg2: i32) -> (i32, i32) {
    %c0_i32 = arith.constant 0 : i32
    return %arg2, %arg1 : i32, i32
  }
  func.func @transform_2(%arg0: i32, %arg1: i32, %arg2: i32) -> (i32, i32) {
    %c0_i32 = arith.constant 0 : i32
    return %arg0, %arg1 : i32, i32
  }
}

module attributes {stable_mosaic.version = 11 : i64} {
  func.func @_attn_kernel(%arg0: i32, %arg1: memref<1x8x3xf32, #tpu.memory_space<vmem>>, %arg2: memref<1x8x3xf32, #tpu.memory_space<vmem>>, %arg3: memref<1x8x2xf32, #tpu.memory_space<vmem>>, %arg4: memref<1x8x2xf32, #tpu.memory_space<vmem>>) attributes {dimension_semantics = [#tpu.dimension_semantics<parallel>], iteration_bounds = array<i64: 32>, scalar_prefetch = 0 : i64, scratch_operands = 0 : i64, tpu.core_type = #tpu.core_type<tc>, window_params = [{transform_indices = @transform_0, window_bounds = array<i64: 1, 8, 3>}, {transform_indices = @transform_1, window_bounds = array<i64: 1, 8, 3>}, {transform_indices = @transform_2, window_bounds = array<i64: 1, 8, 2>}, {transform_indices = @transform_3, window_bounds = array<i64: 1, 8, 2>}]} {
    %c0 = arith.constant 0 : index
    %c0_0 = arith.constant 0 : index
    %c0_1 = arith.constant 0 : index
    %0 = vector.load %arg1[%c0, %c0_0, %c0_1] : memref<1x8x3xf32, #tpu.memory_space<vmem>>, vector<1x8x3xf32>
    %c0_2 = arith.constant 0 : index
    %c0_3 = arith.constant 0 : index
    %c0_4 = arith.constant 0 : index
    %1 = vector.load %arg2[%c0_2, %c0_3, %c0_4] : memref<1x8x3xf32, #tpu.memory_space<vmem>>, vector<1x8x3xf32>
    %c0_5 = arith.constant 0 : index
    %c0_6 = arith.constant 0 : index
    %c0_7 = arith.constant 0 : index
    %2 = vector.load %arg3[%c0_5, %c0_6, %c0_7] : memref<1x8x2xf32, #tpu.memory_space<vmem>>, vector<1x8x2xf32>
    "tpu.trace_start"() <{level = 10 : i32, message = "bqd,bkd->bqk"}> : () -> ()
    %cst = arith.constant dense<0.000000e+00> : vector<1x8x8xf32>
    %3 = tpu.matmul %0, %1, %cst {dimension_numbers = #tpu.dot_dimension_numbers<[2], [2], [1], [1], [0, 0, 0, 1, 1, 1], [0], [0]>} : vector<1x8x3xf32>, vector<1x8x3xf32>, vector<1x8x8xf32> -> vector<1x8x8xf32>
    "tpu.trace_stop"() : () -> ()
    %cst_8 = arith.constant 0.577350259 : f32
    %4 = vector.broadcast %cst_8 : f32 to vector<1x8x8xf32>
    %5 = arith.mulf %3, %4 : vector<1x8x8xf32>
    %cst_9 = arith.constant dense<0xFF800000> : vector<1x8xf32>
    %6 = vector.multi_reduction <maximumf>, %5, %cst_9 [2] : vector<1x8x8xf32> to vector<1x8xf32>
    %7 = vector.shape_cast %6 : vector<1x8xf32> to vector<1x8x1xf32>
    %8 = vector.broadcast %7 : vector<1x8x1xf32> to vector<1x8x8xf32>
    %9 = arith.subf %5, %8 : vector<1x8x8xf32>
    %10 = math.exp %9 : vector<1x8x8xf32>
    "tpu.trace_start"() <{level = 10 : i32, message = "bqk,bkd->bqd"}> : () -> ()
    %cst_10 = arith.constant dense<0.000000e+00> : vector<1x8x2xf32>
    %11 = tpu.matmul %10, %2, %cst_10 {dimension_numbers = #tpu.dot_dimension_numbers<[2], [1], [1], [2], [0, 0, 0, 1, 1, 2], [0], [0]>} : vector<1x8x8xf32>, vector<1x8x2xf32>, vector<1x8x2xf32> -> vector<1x8x2xf32>
    "tpu.trace_stop"() : () -> ()
    %cst_11 = arith.constant dense<0.000000e+00> : vector<1x8xf32>
    %12 = vector.multi_reduction <add>, %10, %cst_11 [2] : vector<1x8x8xf32> to vector<1x8xf32>
    %13 = vector.shape_cast %12 : vector<1x8xf32> to vector<1x8x1xf32>
    %14 = vector.broadcast %13 : vector<1x8x1xf32> to vector<1x8x2xf32>
    %15 = arith.divf %11, %14 : vector<1x8x2xf32>
    %c0_12 = arith.constant 0 : index
    %c0_13 = arith.constant 0 : index
    %c0_14 = arith.constant 0 : index
    %16 = vector.load %arg4[%c0_12, %c0_13, %c0_14] : memref<1x8x2xf32, #tpu.memory_space<vmem>>, vector<1x8x2xf32>
    tpu.vector_store %arg4[%c0_12, %c0_13, %c0_14], %15 {strides = array<i32>} : memref<1x8x2xf32, #tpu.memory_space<vmem>>, vector<1x8x2xf32>,
    return
  }
  func.func @transform_0(%arg0: i32) -> (i32, i32, i32) {
    %c0_i32 = arith.constant 0 : i32
    %c0_i32_0 = arith.constant 0 : i32
    %c0_i32_1 = arith.constant 0 : i32
    return %arg0, %c0_i32, %c0_i32_0 : i32, i32, i32
  }
  func.func @transform_1(%arg0: i32) -> (i32, i32, i32) {
    %c0_i32 = arith.constant 0 : i32
    %c0_i32_0 = arith.constant 0 : i32
    %c0_i32_1 = arith.constant 0 : i32
    return %arg0, %c0_i32, %c0_i32_0 : i32, i32, i32
  }
  func.func @transform_2(%arg0: i32) -> (i32, i32, i32) {
    %c0_i32 = arith.constant 0 : i32
    %c0_i32_0 = arith.constant 0 : i32
    %c0_i32_1 = arith.constant 0 : i32
    return %arg0, %c0_i32, %c0_i32_0 : i32, i32, i32
  }
  func.func @transform_3(%arg0: i32) -> (i32, i32, i32) {
    %c0_i32 = arith.constant 0 : i32
    %c0_i32_0 = arith.constant 0 : i32
    %c0_i32_1 = arith.constant 0 : i32
    return %arg0, %c0_i32, %c0_i32_0 : i32, i32, i32
  }
}

module attributes {stable_mosaic.version = 11 : i64} {
  func.func @_matmul_kernel(%arg0: i32, %arg1: i32, %arg2: i32, %arg3: memref<16x32xf32, #tpu.memory_space<vmem>>, %arg4: memref<32x32xf32, #tpu.memory_space<vmem>>, %arg5: memref<16x32xf32, #tpu.memory_space<vmem>>, %arg6: memref<16x32xf32, #tpu.memory_space<vmem>>) attributes {dimension_semantics = [#tpu.dimension_semantics<parallel>, #tpu.dimension_semantics<parallel>, #tpu.dimension_semantics<arbitrary>], iteration_bounds = array<i64: 1, 1, 1>, scalar_prefetch = 0 : i64, scratch_operands = 1 : i64, tpu.core_type = #tpu.core_type<tc>, window_params = [{transform_indices = @transform_0, window_bounds = array<i64: 16, 32>}, {transform_indices = @transform_1, window_bounds = array<i64: 32, 32>}, {transform_indices = @transform_2, window_bounds = array<i64: 16, 32>}]} {
    %c0_i32 = arith.constant 0 : i32
    %0 = arith.cmpi eq, %arg2, %c0_i32 : i32
    %1 = arith.extui %0 : i1 to i32
    %c0_i32_0 = arith.constant 0 : i32
    %2 = arith.cmpi ne, %1, %c0_i32_0 : i32
    scf.if %2 {
      %cst_10 = arith.constant 0.000000e+00 : f32
      %12 = vector.broadcast %cst_10 : f32 to vector<16x32xf32>
      %c0_11 = arith.constant 0 : index
      %c0_12 = arith.constant 0 : index
      %13 = vector.load %arg6[%c0_11, %c0_12] : memref<16x32xf32, #tpu.memory_space<vmem>>, vector<16x32xf32>
      tpu.vector_store %arg6[%c0_11, %c0_12], %12 {strides = array<i32>} : memref<16x32xf32, #tpu.memory_space<vmem>>, vector<16x32xf32>,
    } else {
    }
    %c0 = arith.constant 0 : index
    %c0_1 = arith.constant 0 : index
    %3 = vector.load %arg6[%c0, %c0_1] : memref<16x32xf32, #tpu.memory_space<vmem>>, vector<16x32xf32>
    %c0_2 = arith.constant 0 : index
    %c0_3 = arith.constant 0 : index
    %4 = vector.load %arg3[%c0_2, %c0_3] : memref<16x32xf32, #tpu.memory_space<vmem>>, vector<16x32xf32>
    %c0_4 = arith.constant 0 : index
    %c0_5 = arith.constant 0 : index
    %5 = vector.load %arg4[%c0_4, %c0_5] : memref<32x32xf32, #tpu.memory_space<vmem>>, vector<32x32xf32>
    %cst = arith.constant dense<0.000000e+00> : vector<16x32xf32>
    %6 = tpu.matmul %4, %5, %cst {dimension_numbers = #tpu.dot_dimension_numbers<[1], [0], [0], [1], [0, 0, 1, 1], [], []>} : vector<16x32xf32>, vector<32x32xf32>, vector<16x32xf32> -> vector<16x32xf32>
    %7 = arith.addf %3, %6 : vector<16x32xf32>
    %c0_6 = arith.constant 0 : index
    %c0_7 = arith.constant 0 : index
    %8 = vector.load %arg6[%c0_6, %c0_7] : memref<16x32xf32, #tpu.memory_space<vmem>>, vector<16x32xf32>
    tpu.vector_store %arg6[%c0_6, %c0_7], %7 {strides = array<i32>} : memref<16x32xf32, #tpu.memory_space<vmem>>, vector<16x32xf32>,
    %c0_i32_8 = arith.constant 0 : i32
    %9 = arith.cmpi eq, %arg2, %c0_i32_8 : i32
    %10 = arith.extui %9 : i1 to i32
    %c0_i32_9 = arith.constant 0 : i32
    %11 = arith.cmpi ne, %10, %c0_i32_9 : i32
    scf.if %11 {
      %c0_10 = arith.constant 0 : index
      %c0_11 = arith.constant 0 : index
      %12 = vector.load %arg6[%c0_10, %c0_11] : memref<16x32xf32, #tpu.memory_space<vmem>>, vector<16x32xf32>
      %c0_12 = arith.constant 0 : index
      %c0_13 = arith.constant 0 : index
      %13 = vector.load %arg5[%c0_12, %c0_13] : memref<16x32xf32, #tpu.memory_space<vmem>>, vector<16x32xf32>
      tpu.vector_store %arg5[%c0_12, %c0_13], %12 {strides = array<i32>} : memref<16x32xf32, #tpu.memory_space<vmem>>, vector<16x32xf32>,
    } else {
    }
    return
  }
  func.func @transform_0(%arg0: i32, %arg1: i32, %arg2: i32) -> (i32, i32) {
    %c0_i32 = arith.constant 0 : i32
    return %arg0, %arg2 : i32, i32
  }
  func.func @transform_1(%arg0: i32, %arg1: i32, %arg2: i32) -> (i32, i32) {
    %c0_i32 = arith.constant 0 : i32
    return %arg2, %arg1 : i32, i32
  }
  func.func @transform_2(%arg0: i32, %arg1: i32, %arg2: i32) -> (i32, i32) {
    %c0_i32 = arith.constant 0 : i32
    return %arg0, %arg1 : i32, i32
  }
}

module attributes {stable_mosaic.version = 11 : i64} {
  func.func @_matmul_kernel(%arg0: i32, %arg1: i32, %arg2: i32, %arg3: memref<16x32xf32, #tpu.memory_space<vmem>>, %arg4: memref<32x3xf32, #tpu.memory_space<vmem>>, %arg5: memref<16x3xf32, #tpu.memory_space<vmem>>, %arg6: memref<16x3xf32, #tpu.memory_space<vmem>>) attributes {dimension_semantics = [#tpu.dimension_semantics<parallel>, #tpu.dimension_semantics<parallel>, #tpu.dimension_semantics<arbitrary>], iteration_bounds = array<i64: 1, 1, 1>, scalar_prefetch = 0 : i64, scratch_operands = 1 : i64, tpu.core_type = #tpu.core_type<tc>, window_params = [{transform_indices = @transform_0, window_bounds = array<i64: 16, 32>}, {transform_indices = @transform_1, window_bounds = array<i64: 32, 3>}, {transform_indices = @transform_2, window_bounds = array<i64: 16, 3>}]} {
    %c0_i32 = arith.constant 0 : i32
    %0 = arith.cmpi eq, %arg2, %c0_i32 : i32
    %1 = arith.extui %0 : i1 to i32
    %c0_i32_0 = arith.constant 0 : i32
    %2 = arith.cmpi ne, %1, %c0_i32_0 : i32
    scf.if %2 {
      %cst_10 = arith.constant 0.000000e+00 : f32
      %12 = vector.broadcast %cst_10 : f32 to vector<16x3xf32>
      %c0_11 = arith.constant 0 : index
      %c0_12 = arith.constant 0 : index
      %13 = vector.load %arg6[%c0_11, %c0_12] : memref<16x3xf32, #tpu.memory_space<vmem>>, vector<16x3xf32>
      tpu.vector_store %arg6[%c0_11, %c0_12], %12 {strides = array<i32>} : memref<16x3xf32, #tpu.memory_space<vmem>>, vector<16x3xf32>,
    } else {
    }
    %c0 = arith.constant 0 : index
    %c0_1 = arith.constant 0 : index
    %3 = vector.load %arg6[%c0, %c0_1] : memref<16x3xf32, #tpu.memory_space<vmem>>, vector<16x3xf32>
    %c0_2 = arith.constant 0 : index
    %c0_3 = arith.constant 0 : index
    %4 = vector.load %arg3[%c0_2, %c0_3] : memref<16x32xf32, #tpu.memory_space<vmem>>, vector<16x32xf32>
    %c0_4 = arith.constant 0 : index
    %c0_5 = arith.constant 0 : index
    %5 = vector.load %arg4[%c0_4, %c0_5] : memref<32x3xf32, #tpu.memory_space<vmem>>, vector<32x3xf32>
    %cst = arith.constant dense<0.000000e+00> : vector<16x3xf32>
    %6 = tpu.matmul %4, %5, %cst {dimension_numbers = #tpu.dot_dimension_numbers<[1], [0], [0], [1], [0, 0, 1, 1], [], []>} : vector<16x32xf32>, vector<32x3xf32>, vector<16x3xf32> -> vector<16x3xf32>
    %7 = arith.addf %3, %6 : vector<16x3xf32>
    %c0_6 = arith.constant 0 : index
    %c0_7 = arith.constant 0 : index
    %8 = vector.load %arg6[%c0_6, %c0_7] : memref<16x3xf32, #tpu.memory_space<vmem>>, vector<16x3xf32>
    tpu.vector_store %arg6[%c0_6, %c0_7], %7 {strides = array<i32>} : memref<16x3xf32, #tpu.memory_space<vmem>>, vector<16x3xf32>,
    %c0_i32_8 = arith.constant 0 : i32
    %9 = arith.cmpi eq, %arg2, %c0_i32_8 : i32
    %10 = arith.extui %9 : i1 to i32
    %c0_i32_9 = arith.constant 0 : i32
    %11 = arith.cmpi ne, %10, %c0_i32_9 : i32
    scf.if %11 {
      %c0_10 = arith.constant 0 : index
      %c0_11 = arith.constant 0 : index
      %12 = vector.load %arg6[%c0_10, %c0_11] : memref<16x3xf32, #tpu.memory_space<vmem>>, vector<16x3xf32>
      %c0_12 = arith.constant 0 : index
      %c0_13 = arith.constant 0 : index
      %13 = vector.load %arg5[%c0_12, %c0_13] : memref<16x3xf32, #tpu.memory_space<vmem>>, vector<16x3xf32>
      tpu.vector_store %arg5[%c0_12, %c0_13], %12 {strides = array<i32>} : memref<16x3xf32, #tpu.memory_space<vmem>>, vector<16x3xf32>,
    } else {
    }
    return
  }
  func.func @transform_0(%arg0: i32, %arg1: i32, %arg2: i32) -> (i32, i32) {
    %c0_i32 = arith.constant 0 : i32
    return %arg0, %arg2 : i32, i32
  }
  func.func @transform_1(%arg0: i32, %arg1: i32, %arg2: i32) -> (i32, i32) {
    %c0_i32 = arith.constant 0 : i32
    return %arg2, %arg1 : i32, i32
  }
  func.func @transform_2(%arg0: i32, %arg1: i32, %arg2: i32) -> (i32, i32) {
    %c0_i32 = arith.constant 0 : i32
    return %arg0, %arg1 : i32, i32
  }
}

module attributes {stable_mosaic.version = 11 : i64} {
  func.func @_expert_kernel(%arg0: i32, %arg1: memref<16x32xf32, #tpu.memory_space<vmem>>, %arg2: memref<32x64xf32, #tpu.memory_space<vmem>>, %arg3: memref<32x64xf32, #tpu.memory_space<vmem>>, %arg4: memref<64x32xf32, #tpu.memory_space<vmem>>, %arg5: memref<16x32xf32, #tpu.memory_space<vmem>>) attributes {dimension_semantics = [#tpu.dimension_semantics<parallel>], iteration_bounds = array<i64: 1>, scalar_prefetch = 0 : i64, scratch_operands = 0 : i64, tpu.core_type = #tpu.core_type<tc>, window_params = [{transform_indices = @transform_0, window_bounds = array<i64: 16, 32>}, {pipeline_mode = #tpu.pipeline_mode<synchronous>, transform_indices = @transform_1, window_bounds = array<i64: 32, 64>}, {pipeline_mode = #tpu.pipeline_mode<synchronous>, transform_indices = @transform_2, window_bounds = array<i64: 32, 64>}, {pipeline_mode = #tpu.pipeline_mode<synchronous>, transform_indices = @transform_3, window_bounds = array<i64: 64, 32>}, {transform_indices = @transform_4, window_bounds = array<i64: 16, 32>}]} {
    %c0 = arith.constant 0 : index
    %c0_0 = arith.constant 0 : index
    %0 = vector.load %arg1[%c0, %c0_0] : memref<16x32xf32, #tpu.memory_space<vmem>>, vector<16x32xf32>
    %c0_1 = arith.constant 0 : index
    %c0_2 = arith.constant 0 : index
    %1 = vector.load %arg2[%c0_1, %c0_2] : memref<32x64xf32, #tpu.memory_space<vmem>>, vector<32x64xf32>
    %cst = arith.constant dense<0.000000e+00> : vector<16x64xf32>
    %2 = tpu.matmul %0, %1, %cst {dimension_numbers = #tpu.dot_dimension_numbers<[1], [0], [0], [1], [0, 0, 1, 1], [], []>} : vector<16x32xf32>, vector<32x64xf32>, vector<16x64xf32> -> vector<16x64xf32>
    %c0_3 = arith.constant 0 : index
    %c0_4 = arith.constant 0 : index
    %3 = vector.load %arg3[%c0_3, %c0_4] : memref<32x64xf32, #tpu.memory_space<vmem>>, vector<32x64xf32>
    %cst_5 = arith.constant dense<0.000000e+00> : vector<16x64xf32>
    %4 = tpu.matmul %0, %3, %cst_5 {dimension_numbers = #tpu.dot_dimension_numbers<[1], [0], [0], [1], [0, 0, 1, 1], [], []>} : vector<16x32xf32>, vector<32x64xf32>, vector<16x64xf32> -> vector<16x64xf32>
    %cst_6 = arith.constant 0.000000e+00 : f32
    %5 = vector.broadcast %cst_6 : f32 to vector<16x64xf32>
    %6 = arith.subf %5, %2 : vector<16x64xf32>
    %7 = math.exp %6 : vector<16x64xf32>
    %cst_7 = arith.constant 1.000000e+00 : f32
    %8 = vector.broadcast %cst_7 : f32 to vector<16x64xf32>
    %9 = arith.addf %8, %7 : vector<16x64xf32>
    %cst_8 = arith.constant 1.000000e+00 : f32
    %10 = vector.broadcast %cst_8 : f32 to vector<16x64xf32>
    %11 = arith.divf %10, %9 : vector<16x64xf32>
    %12 = arith.mulf %2, %11 : vector<16x64xf32>
    %13 = arith.mulf %12, %4 : vector<16x64xf32>
    %c0_9 = arith.constant 0 : index
    %c0_10 = arith.constant 0 : index
    %14 = vector.load %arg4[%c0_9, %c0_10] : memref<64x32xf32, #tpu.memory_space<vmem>>, vector<64x32xf32>
    %cst_11 = arith.constant dense<0.000000e+00> : vector<16x32xf32>
    %15 = tpu.matmul %13, %14, %cst_11 {dimension_numbers = #tpu.dot_dimension_numbers<[1], [0], [0], [1], [0, 0, 1, 1], [], []>} : vector<16x64xf32>, vector<64x32xf32>, vector<16x32xf32> -> vector<16x32xf32>
    %c0_12 = arith.constant 0 : index
    %c0_13 = arith.constant 0 : index
    %16 = vector.load %arg5[%c0_12, %c0_13] : memref<16x32xf32, #tpu.memory_space<vmem>>, vector<16x32xf32>
    tpu.vector_store %arg5[%c0_12, %c0_13], %15 {strides = array<i32>} : memref<16x32xf32, #tpu.memory_space<vmem>>, vector<16x32xf32>,
    return
  }
  func.func @transform_0(%arg0: i32) -> (i32, i32) {
    %c0_i32 = arith.constant 0 : i32
    %c0_i32_0 = arith.constant 0 : i32
    return %arg0, %c0_i32 : i32, i32
  }
  func.func @transform_1(%arg0: i32) -> (i32, i32) {
    %c0_i32 = arith.constant 0 : i32
    %c0_i32_0 = arith.constant 0 : i32
    %c0_i32_1 = arith.constant 0 : i32
    return %c0_i32, %c0_i32_0 : i32, i32
  }
  func.func @transform_2(%arg0: i32) -> (i32, i32) {
    %c0_i32 = arith.constant 0 : i32
    %c0_i32_0 = arith.constant 0 : i32
    %c0_i32_1 = arith.constant 0 : i32
    return %c0_i32, %c0_i32_0 : i32, i32
  }
  func.func @transform_3(%arg0: i32) -> (i32, i32) {
    %c0_i32 = arith.constant 0 : i32
    %c0_i32_0 = arith.constant 0 : i32
    %c0_i32_1 = arith.constant 0 : i32
    return %c0_i32, %c0_i32_0 : i32, i32
  }
  func.func @transform_4(%arg0: i32) -> (i32, i32) {
    %c0_i32 = arith.constant 0 : i32
    %c0_i32_0 = arith.constant 0 : i32
    return %arg0, %c0_i32 : i32, i32
  }
}

</mosaic_0001>

<llo_original>
// kernel: decoder_layer.23
$region0: #{decoder_layer.23}
  #allocation0 [shape = 'u32[]', space=smem, size = 0x4, offset = 0x4, fixed_abs, tag = 'smem constant byte address 0x4 - core index']
  #allocation1 [shape = 'u32[144,128]{1,0:T(1,128)}', space=vmem, size = 0x12000, scoped, tag = 'internal scratch']
  #allocation2 [shape = 'f32[16,16]{1,0:T(8,128)}', space=vmem, size = 0x2000, scoped, tag = 'scratch operand']
  %s0 = inlined_call_operand.vmem [shape: f32[16,8], index: 0, kind: input, shape index: {}]
  %s1 = inlined_call_operand.vmem [shape: f32[8,16], index: 1, kind: input, shape index: {}]
  %s2 = inlined_call_operand.vmem [shape: f32[16,16], index: 2, kind: output, shape index: {}]
  %s3 = sld [smem:[#allocation0]]
  $region26: #{decoder_layer.23} parent=0
    _
  %s5 = ssub.s32 1, %s3
  %s6 = scalar_select 0, %s5, %s3
  // Predicated region
  $region2: #{decoder_layer.23} parent=0 // pred_check
    _
  $region3: #{decoder_layer.23} parent=0 // pred_check_branch
    %8 = sbr.rel (0) target = $region5
  $region4: #{decoder_layer.23} parent=0 // pred_region
    _
  $region5: #{decoder_layer.23} parent=0 // pred_fallthru
    _
  // Predicated region
  $region6: #{decoder_layer.23} parent=0 // pred_check
    _
  $region7: #{decoder_layer.23} parent=0 // pred_check_branch
    %10 = sbr.rel (0) target = $region9
  $region8: #{decoder_layer.23} parent=0 // pred_region
    _
  $region9: #{decoder_layer.23} parent=0 // pred_fallthru
    _
  %p11 = scmp.eq.s32.totalorder 0, 0
  // Predicated region
  $region10: #{decoder_layer.23} parent=0 // pred_check
    %p12 = pneg %p11
  $region11: #{decoder_layer.23} parent=0 // pred_check_branch
    %14 = sbr.rel (%p12) target = $region13
  $region12: #{decoder_layer.23} parent=0 // pred_region
    %vm15 = vcmask 130048
    %16 = vst.msk [vmem:[#allocation2] sm:$0xff] %vm15, 0.0
    %17 = vst.msk [vmem:[#allocation2 + $0x8] sm:$0xff] %vm15, 0.0
  $region13: #{decoder_layer.23} parent=0 // pred_fallthru
    _
  %v18 = vld [vmem:[#allocation2] sm:$0xff]
  %v19 = vld [vmem:[#allocation2 + $0x8] sm:$0xff]
  %v20 = vld [vmem:[%s0] sm:$0xff]
  %v21 = vld [vmem:[%s0 + $0x8] sm:$0xff]
  %v22 = vld [vmem:[%s1] sm:$0xff]
  %vm23 = vcmask 64512
  %v25 = vsel %vm23, %v20, 0
  %v28 = vsel %vm23, %v21, 0
  %30 = vmatprep.subr.mxu0 0.0
  %31 = vmatpush1.msra.mxu0 0.0
  %32 = vmatprep.subr.mxu0 0.0
  %33 = vmatpush1.msra.mxu0 0.0
  %34 = vmatprep.subr.mxu0 0.0
  %35 = vmatpush1.msra.mxu0 0.0
  %36 = vmatprep.subr.mxu0 0.0
  %37 = vmatpush1.msra.mxu0 0.0
  %38 = vmatprep.subr.mxu0 0.0
  %39 = vmatpush1.msra.mxu0 0.0
  %40 = vmatprep.subr.mxu0 0.0
  %41 = vmatpush1.msra.mxu0 0.0
  %42 = vmatprep.subr.mxu0 0.0
  %43 = vmatpush1.msra.mxu0 0.0
  %44 = vmatprep.subr.mxu0 0.0
  %45 = vmatpush1.msra.mxu0 0.0
  %46 = vmatprep.subr.mxu0 0.0
  %47 = vmatpush1.msra.mxu0 0.0
  %48 = vmatprep.subr.mxu0 0.0
  %49 = vmatpush1.msra.mxu0 0.0
  %50 = vmatprep.subr.mxu0 0.0
  %51 = vmatpush1.msra.mxu0 0.0
  %52 = vmatprep.subr.mxu0 0.0
  %53 = vmatpush1.msra.mxu0 0.0
  %54 = vmatprep.subr.mxu0 0.0
  %55 = vmatpush1.msra.mxu0 0.0
  %56 = vmatprep.subr.mxu0 0.0
  %57 = vmatpush1.msra.mxu0 0.0
  %58 = vmatprep.subr.mxu0 0.0
  %59 = vmatpush1.msra.mxu0 0.0
  %60 = vmatprep.subr.mxu0 0.0
  %61 = vmatpush1.msra.mxu0 %v22
  %62 = vmatprep.subr.mxu0 0.0
  %63 = vmatpush2.msra.mxu0 0.0
  %64 = vmatprep.subr.mxu0 0.0
  %65 = vmatpush2.msra.mxu0 0.0
  %66 = vmatprep.subr.mxu0 0.0
  %67 = vmatpush2.msra.mxu0 0.0
  %68 = vmatprep.subr.mxu0 0.0
  %69 = vmatpush2.msra.mxu0 0.0
  %70 = vmatprep.subr.mxu0 0.0
  %71 = vmatpush2.msra.mxu0 0.0
  %72 = vmatprep.subr.mxu0 0.0
  %73 = vmatpush2.msra.mxu0 0.0
  %74 = vmatprep.subr.mxu0 0.0
  %75 = vmatpush2.msra.mxu0 0.0
  %76 = vmatprep.subr.mxu0 0.0
  %77 = vmatpush2.msra.mxu0 0.0
  %78 = vmatprep.subr.mxu0 0.0
  %79 = vmatpush2.msra.mxu0 0.0
  %80 = vmatprep.subr.mxu0 0.0
  %81 = vmatpush2.msra.mxu0 0.0
  %82 = vmatprep.subr.mxu0 0.0
  %83 = vmatpush2.msra.mxu0 0.0
  %84 = vmatprep.subr.mxu0 0.0
  %85 = vmatpush2.msra.mxu0 0.0
  %86 = vmatprep.subr.mxu0 0.0
  %87 = vmatpush2.msra.mxu0 0.0
  %88 = vmatprep.subr.mxu0 0.0
  %89 = vmatpush2.msra.mxu0 0.0
  %90 = vmatprep.subr.mxu0 0.0
  %91 = vmatpush2.msra.mxu0 0.0
  %92 = vmatprep.subr.mxu0 0.0
  %93 = vmatpush2.msra.mxu0 0.0
  %94 = vmatprep.mubr.f32.mxu0 0.0
  %95 = vmatmul.mubr.f32.gmra.mxu0 %v25
  %v96 = vpop.f32.mrf.mxu0
  %v97 = vadd.f32 0.0, %v96
  %v98 = vpop.f32.mrf.mxu0
  %99 = vmatprep.mubr.f32.mxu0 0.0
  %100 = vmatmul.mubr.f32.gmra.mxu0 %v28
  %v101 = vpop.f32.mrf.mxu0
  %v102 = vadd.f32 0.0, %v101
  %v103 = vpop.f32.mrf.mxu0
  %104 = vdwg.mxu0
  %v105 = vadd.f32 %v18, %v97
  %v106 = vadd.f32 %v19, %v102
  %vm107 = vcmask 130048
  %108 = vst.msk [vmem:[#allocation2] sm:$0xff] %vm107, %v105
  %109 = vst.msk [vmem:[#allocation2 + $0x8] sm:$0xff] %vm107, %v106
  // Predicated region
  $region14: #{decoder_layer.23} parent=0 // pred_check
    %p110 = pneg %p11
  $region15: #{decoder_layer.23} parent=0 // pred_check_branch
    %112 = sbr.rel (%p110) target = $region17
  $region16: #{decoder_layer.23} parent=0 // pred_region
    %v113 = vld [vmem:[#allocation2] sm:$0xff]
    %v114 = vld [vmem:[#allocation2 + $0x8] sm:$0xff]
    %115 = vst.msk [vmem:[%s2] sm:$0xff] %vm107, %v113
    %116 = vst.msk [vmem:[%s2 + $0x8] sm:$0xff] %vm107, %v114
  $region17: #{decoder_layer.23} parent=0 // pred_fallthru
    _
  // Predicated region
  $region18: #{decoder_layer.23} parent=0 // pred_check
    _
  $region19: #{decoder_layer.23} parent=0 // pred_check_branch
    %118 = sbr.rel (0) target = $region21
  $region20: #{decoder_layer.23} parent=0 // pred_region
    _
  $region21: #{decoder_layer.23} parent=0 // pred_fallthru
    _
  // Predicated region
  $region22: #{decoder_layer.23} parent=0 // pred_check
    _
  $region23: #{decoder_layer.23} parent=0 // pred_check_branch
    %120 = sbr.rel (0) target = $region25
  $region24: #{decoder_layer.23} parent=0 // pred_region
    _
  $region25: #{decoder_layer.23} parent=0 // pred_fallthru
    _

// kernel: decoder_layer.16
$region0: #{decoder_layer.16}
  #allocation0 [shape = 'u32[]', space=smem, size = 0x4, offset = 0x4, fixed_abs, tag = 'smem constant byte address 0x4 - core index']
  #allocation1 [shape = 'u32[144,128]{1,0:T(1,128)}', space=vmem, size = 0x12000, scoped, tag = 'internal scratch']
  %s0 = inlined_call_operand.vmem [shape: f32[16,32], index: 0, kind: input, shape index: {}]
  %s1 = inlined_call_operand.vmem [shape: f32[1,32], index: 1, kind: input, shape index: {}]
  %s2 = inlined_call_operand.vmem [shape: f32[16,32], index: 2, kind: output, shape index: {}]
  %s3 = sld [smem:[#allocation0]]
  $region18: #{decoder_layer.16} parent=0
    _
  %s5 = ssub.s32 1, %s3
  %s6 = scalar_select 0, %s5, %s3
  // Predicated region
  $region2: #{decoder_layer.16} parent=0 // pred_check
    _
  $region3: #{decoder_layer.16} parent=0 // pred_check_branch
    %8 = sbr.rel (0) target = $region5
  $region4: #{decoder_layer.16} parent=0 // pred_region
    _
  $region5: #{decoder_layer.16} parent=0 // pred_fallthru
    _
  // Predicated region
  $region6: #{decoder_layer.16} parent=0 // pred_check
    _
  $region7: #{decoder_layer.16} parent=0 // pred_check_branch
    %10 = sbr.rel (0) target = $region9
  $region8: #{decoder_layer.16} parent=0 // pred_region
    _
  $region9: #{decoder_layer.16} parent=0 // pred_fallthru
    _
  %v11 = vld [vmem:[%s0] sm:$0xff]
  %v12 = vld [vmem:[%s0 + $0x8] sm:$0xff]
  %v13 = vmul.f32 %v11, %v11
  %v14 = vmul.f32 %v12, %v12
  %vm15 = vcmask 261120
  %v16 = vsel %vm15, %v13, 0.0
  %17 = vadd.xlane.f32.xlu0 %v16
  %v18 = vpop.xlane.xlu0 %17
  %v19 = vsel %vm15, %v14, 0.0
  %20 = vadd.xlane.f32.xlu0 %v19
  %v21 = vpop.xlane.xlu0 %20
  %v22 = vrcp.pop 32.0
  %v23 = vmul.f32 %v18, %v22
  %v24 = vmul.f32 %v21, %v22
  %v25 = vadd.f32 %v23, 1e-05
  %v26 = vadd.f32 %v24, 1e-05
  %v27 = vrsqrt.pop %v25
  %v28 = vrsqrt.pop %v26
  %v29 = vld [vmem:[%s1] sm:$0x1]
  %v30 = vmul.f32 %v11, %v27
  %v31 = vmul.f32 %v12, %v28
  %v33 = vlaneseq
  %v34 = vshrl.u32 %v33, 7
  %v35 = vsub.s32 0, %v34
  %v36 = vrot.slane %v29, %v35
  %v38 = vmul.f32 %v36, %v30
  %v39 = vmul.f32 %v36, %v31
  %40 = vst.msk [vmem:[%s2] sm:$0xff] %vm15, %v38
  %41 = vst.msk [vmem:[%s2 + $0x8] sm:$0xff] %vm15, %v39
  // Predicated region
  $region10: #{decoder_layer.16} parent=0 // pred_check
    _
  $region11: #{decoder_layer.16} parent=0 // pred_check_branch
    %43 = sbr.rel (0) target = $region13
  $region12: #{decoder_layer.16} parent=0 // pred_region
    _
  $region13: #{decoder_layer.16} parent=0 // pred_fallthru
    _
  // Predicated region
  $region14: #{decoder_layer.16} parent=0 // pred_check
    _
  $region15: #{decoder_layer.16} parent=0 // pred_check_branch
    %45 = sbr.rel (0) target = $region17
  $region16: #{decoder_layer.16} parent=0 // pred_region
    _
  $region17: #{decoder_layer.16} parent=0 // pred_fallthru
    _

// kernel: decoder_layer.18
$region0: #{decoder_layer.18}
  #allocation0 [shape = 'u32[]', space=smem, size = 0x4, offset = 0x4, fixed_abs, tag = 'smem constant byte address 0x4 - core index']
  #allocation1 [shape = 'u32[144,128]{1,0:T(1,128)}', space=vmem, size = 0x12000, scoped, tag = 'internal scratch']
  #allocation2 [shape = 'f32[16,8]{1,0:T(8,128)}', space=vmem, size = 0x2000, scoped, tag = 'scratch operand']
  %s0 = inlined_call_operand.vmem [shape: f32[16,32], index: 0, kind: input, shape index: {}]
  %s1 = inlined_call_operand.vmem [shape: f32[32,8], index: 1, kind: input, shape index: {}]
  %s2 = inlined_call_operand.vmem [shape: f32[16,8], index: 2, kind: output, shape index: {}]
  %s3 = sld [smem:[#allocation0]]
  $region26: #{decoder_layer.18} parent=0
    _
  %s5 = ssub.s32 1, %s3
  %s6 = scalar_select 0, %s5, %s3
  // Predicated region
  $region2: #{decoder_layer.18} parent=0 // pred_check
    _
  $region3: #{decoder_layer.18} parent=0 // pred_check_branch
    %8 = sbr.rel (0) target = $region5
  $region4: #{decoder_layer.18} parent=0 // pred_region
    _
  $region5: #{decoder_layer.18} parent=0 // pred_fallthru
    _
  // Predicated region
  $region6: #{decoder_layer.18} parent=0 // pred_check
    _
  $region7: #{decoder_layer.18} parent=0 // pred_check_branch
    %10 = sbr.rel (0) target = $region9
  $region8: #{decoder_layer.18} parent=0 // pred_region
    _
  $region9: #{decoder_layer.18} parent=0 // pred_fallthru
    _
  %p11 = scmp.eq.s32.totalorder 0, 0
  // Predicated region
  $region10: #{decoder_layer.18} parent=0 // pred_check
    %p12 = pneg %p11
  $region11: #{decoder_layer.18} parent=0 // pred_check_branch
    %14 = sbr.rel (%p12) target = $region13
  $region12: #{decoder_layer.18} parent=0 // pred_region
    %vm15 = vcmask 64512
    %16 = vst.msk [vmem:[#allocation2] sm:$0xff] %vm15, 0.0
    %17 = vst.msk [vmem:[#allocation2 + $0x8] sm:$0xff] %vm15, 0.0
  $region13: #{decoder_layer.18} parent=0 // pred_fallthru
    _
  %v18 = vld [vmem:[#allocation2] sm:$0xff]
  %v19 = vld [vmem:[#allocation2 + $0x8] sm:$0xff]
  %v20 = vld [vmem:[%s0] sm:$0xff]
  %v21 = vld [vmem:[%s0 + $0x8] sm:$0xff]
  %v22 = vld [vmem:[%s1] sm:$0xff]
  %v23 = vld [vmem:[%s1 + $0x8] sm:$0xff]
  %v24 = vld [vmem:[%s1 + $0x10] sm:$0xff]
  %v25 = vld [vmem:[%s1 + $0x18] sm:$0xff]
  %vm26 = vcmask 261120
  %v28 = vsel %vm26, %v20, 0
  %v31 = vsel %vm26, %v21, 0
  %33 = vmatprep.subr.mxu0 0.0
  %34 = vmatpush1.msra.mxu0 0.0
  %35 = vmatprep.subr.mxu0 0.0
  %36 = vmatpush1.msra.mxu0 0.0
  %37 = vmatprep.subr.mxu0 0.0
  %38 = vmatpush1.msra.mxu0 0.0
  %39 = vmatprep.subr.mxu0 0.0
  %40 = vmatpush1.msra.mxu0 0.0
  %41 = vmatprep.subr.mxu0 0.0
  %42 = vmatpush1.msra.mxu0 0.0
  %43 = vmatprep.subr.mxu0 0.0
  %44 = vmatpush1.msra.mxu0 0.0
  %45 = vmatprep.subr.mxu0 0.0
  %46 = vmatpush1.msra.mxu0 0.0
  %47 = vmatprep.subr.mxu0 0.0
  %48 = vmatpush1.msra.mxu0 0.0
  %49 = vmatprep.subr.mxu0 0.0
  %50 = vmatpush1.msra.mxu0 0.0
  %51 = vmatprep.subr.mxu0 0.0
  %52 = vmatpush1.msra.mxu0 0.0
  %53 = vmatprep.subr.mxu0 0.0
  %54 = vmatpush1.msra.mxu0 0.0
  %55 = vmatprep.subr.mxu0 0.0
  %56 = vmatpush1.msra.mxu0 0.0
  %57 = vmatprep.subr.mxu0 0.0
  %58 = vmatpush1.msra.mxu0 %v25
  %59 = vmatprep.subr.mxu0 0.0
  %60 = vmatpush1.msra.mxu0 %v24
  %61 = vmatprep.subr.mxu0 0.0
  %62 = vmatpush1.msra.mxu0 %v23
  %63 = vmatprep.subr.mxu0 0.0
  %64 = vmatpush1.msra.mxu0 %v22
  %65 = vmatprep.subr.mxu0 0.0
  %66 = vmatpush2.msra.mxu0 0.0
  %67 = vmatprep.subr.mxu0 0.0
  %68 = vmatpush2.msra.mxu0 0.0
  %69 = vmatprep.subr.mxu0 0.0
  %70 = vmatpush2.msra.mxu0 0.0
  %71 = vmatprep.subr.mxu0 0.0
  %72 = vmatpush2.msra.mxu0 0.0
  %73 = vmatprep.subr.mxu0 0.0
  %74 = vmatpush2.msra.mxu0 0.0
  %75 = vmatprep.subr.mxu0 0.0
  %76 = vmatpush2.msra.mxu0 0.0
  %77 = vmatprep.subr.mxu0 0.0
  %78 = vmatpush2.msra.mxu0 0.0
  %79 = vmatprep.subr.mxu0 0.0
  %80 = vmatpush2.msra.mxu0 0.0
  %81 = vmatprep.subr.mxu0 0.0
  %82 = vmatpush2.msra.mxu0 0.0
  %83 = vmatprep.subr.mxu0 0.0
  %84 = vmatpush2.msra.mxu0 0.0
  %85 = vmatprep.subr.mxu0 0.0
  %86 = vmatpush2.msra.mxu0 0.0
  %87 = vmatprep.subr.mxu0 0.0
  %88 = vmatpush2.msra.mxu0 0.0
  %89 = vmatprep.subr.mxu0 0.0
  %90 = vmatpush2.msra.mxu0 0.0
  %91 = vmatprep.subr.mxu0 0.0
  %92 = vmatpush2.msra.mxu0 0.0
  %93 = vmatprep.subr.mxu0 0.0
  %94 = vmatpush2.msra.mxu0 0.0
  %95 = vmatprep.subr.mxu0 0.0
  %96 = vmatpush2.msra.mxu0 0.0
  %97 = vmatprep.mubr.f32.mxu0 0.0
  %98 = vmatmul.mubr.f32.gmra.mxu0 %v28
  %v99 = vpop.f32.mrf.mxu0
  %v100 = vadd.f32 0.0, %v99
  %v101 = vpop.f32.mrf.mxu0
  %102 = vmatprep.mubr.f32.mxu0 0.0
  %103 = vmatmul.mubr.f32.gmra.mxu0 %v31
  %v104 = vpop.f32.mrf.mxu0
  %v105 = vadd.f32 0.0, %v104
  %v106 = vpop.f32.mrf.mxu0
  %107 = vdwg.mxu0
  %v108 = vadd.f32 %v18, %v100
  %v109 = vadd.f32 %v19, %v105
  %vm110 = vcmask 64512
  %111 = vst.msk [vmem:[#allocation2] sm:$0xff] %vm110, %v108
  %112 = vst.msk [vmem:[#allocation2 + $0x8] sm:$0xff] %vm110, %v109
  // Predicated region
  $region14: #{decoder_layer.18} parent=0 // pred_check
    %p113 = pneg %p11
  $region15: #{decoder_layer.18} parent=0 // pred_check_branch
    %115 = sbr.rel (%p113) target = $region17
  $region16: #{decoder_layer.18} parent=0 // pred_region
    %v116 = vld [vmem:[#allocation2] sm:$0xff]
    %v117 = vld [vmem:[#allocation2 + $0x8] sm:$0xff]
    %118 = vst.msk [vmem:[%s2] sm:$0xff] %vm110, %v116
    %119 = vst.msk [vmem:[%s2 + $0x8] sm:$0xff] %vm110, %v117
  $region17: #{decoder_layer.18} parent=0 // pred_fallthru
    _
  // Predicated region
  $region18: #{decoder_layer.18} parent=0 // pred_check
    _
  $region19: #{decoder_layer.18} parent=0 // pred_check_branch
    %121 = sbr.rel (0) target = $region21
  $region20: #{decoder_layer.18} parent=0 // pred_region
    _
  $region21: #{decoder_layer.18} parent=0 // pred_fallthru
    _
  // Predicated region
  $region22: #{decoder_layer.18} parent=0 // pred_check
    _
  $region23: #{decoder_layer.18} parent=0 // pred_check_branch
    %123 = sbr.rel (0) target = $region25
  $region24: #{decoder_layer.18} parent=0 // pred_region
    _
  $region25: #{decoder_layer.18} parent=0 // pred_fallthru
    _

// kernel: decoder_layer.20
$region0: #{decoder_layer.20}
  #allocation0 [shape = 'u32[]', space=smem, size = 0x4, offset = 0x4, fixed_abs, tag = 'smem constant byte address 0x4 - core index']
  #allocation1 [shape = 'u32[144,128]{1,0:T(1,128)}', space=vmem, size = 0x12000, scoped, tag = 'internal scratch']
  #allocation2 [shape = 'f32[16,32]{1,0:T(8,128)}', space=vmem, size = 0x2000, scoped, tag = 'scratch operand']
  %s0 = inlined_call_operand.vmem [shape: f32[16,8], index: 0, kind: input, shape index: {}]
  %s1 = inlined_call_operand.vmem [shape: f32[8,32], index: 1, kind: input, shape index: {}]
  %s2 = inlined_call_operand.vmem [shape: f32[16,32], index: 2, kind: output, shape index: {}]
  %s3 = sld [smem:[#allocation0]]
  $region26: #{decoder_layer.20} parent=0
    _
  %s5 = ssub.s32 1, %s3
  %s6 = scalar_select 0, %s5, %s3
  // Predicated region
  $region2: #{decoder_layer.20} parent=0 // pred_check
    _
  $region3: #{decoder_layer.20} parent=0 // pred_check_branch
    %8 = sbr.rel (0) target = $region5
  $region4: #{decoder_layer.20} parent=0 // pred_region
    _
  $region5: #{decoder_layer.20} parent=0 // pred_fallthru
    _
  // Predicated region
  $region6: #{decoder_layer.20} parent=0 // pred_check
    _
  $region7: #{decoder_layer.20} parent=0 // pred_check_branch
    %10 = sbr.rel (0) target = $region9
  $region8: #{decoder_layer.20} parent=0 // pred_region
    _
  $region9: #{decoder_layer.20} parent=0 // pred_fallthru
    _
  %p11 = scmp.eq.s32.totalorder 0, 0
  // Predicated region
  $region10: #{decoder_layer.20} parent=0 // pred_check
    %p12 = pneg %p11
  $region11: #{decoder_layer.20} parent=0 // pred_check_branch
    %14 = sbr.rel (%p12) target = $region13
  $region12: #{decoder_layer.20} parent=0 // pred_region
    %vm15 = vcmask 261120
    %16 = vst.msk [vmem:[#allocation2] sm:$0xff] %vm15, 0.0
    %17 = vst.msk [vmem:[#allocation2 + $0x8] sm:$0xff] %vm15, 0.0
  $region13: #{decoder_layer.20} parent=0 // pred_fallthru
    _
  %v18 = vld [vmem:[#allocation2] sm:$0xff]
  %v19 = vld [vmem:[#allocation2 + $0x8] sm:$0xff]
  %v20 = vld [vmem:[%s0] sm:$0xff]
  %v21 = vld [vmem:[%s0 + $0x8] sm:$0xff]
  %v22 = vld [vmem:[%s1] sm:$0xff]
  %vm23 = vcmask 64512
  %v25 = vsel %vm23, %v20, 0
  %v28 = vsel %vm23, %v21, 0
  %30 = vmatprep.subr.mxu0 0.0
  %31 = vmatpush1.msra.mxu0 0.0
  %32 = vmatprep.subr.mxu0 0.0
  %33 = vmatpush1.msra.mxu0 0.0
  %34 = vmatprep.subr.mxu0 0.0
  %35 = vmatpush1.msra.mxu0 0.0
  %36 = vmatprep.subr.mxu0 0.0
  %37 = vmatpush1.msra.mxu0 0.0
  %38 = vmatprep.subr.mxu0 0.0
  %39 = vmatpush1.msra.mxu0 0.0
  %40 = vmatprep.subr.mxu0 0.0
  %41 = vmatpush1.msra.mxu0 0.0
  %42 = vmatprep.subr.mxu0 0.0
  %43 = vmatpush1.msra.mxu0 0.0
  %44 = vmatprep.subr.mxu0 0.0
  %45 = vmatpush1.msra.mxu0 0.0
  %46 = vmatprep.subr.mxu0 0.0
  %47 = vmatpush1.msra.mxu0 0.0
  %48 = vmatprep.subr.mxu0 0.0
  %49 = vmatpush1.msra.mxu0 0.0
  %50 = vmatprep.subr.mxu0 0.0
  %51 = vmatpush1.msra.mxu0 0.0
  %52 = vmatprep.subr.mxu0 0.0
  %53 = vmatpush1.msra.mxu0 0.0
  %54 = vmatprep.subr.mxu0 0.0
  %55 = vmatpush1.msra.mxu0 0.0
  %56 = vmatprep.subr.mxu0 0.0
  %57 = vmatpush1.msra.mxu0 0.0
  %58 = vmatprep.subr.mxu0 0.0
  %59 = vmatpush1.msra.mxu0 0.0
  %60 = vmatprep.subr.mxu0 0.0
  %61 = vmatpush1.msra.mxu0 %v22
  %62 = vmatprep.subr.mxu0 0.0
  %63 = vmatpush2.msra.mxu0 0.0
  %64 = vmatprep.subr.mxu0 0.0
  %65 = vmatpush2.msra.mxu0 0.0
  %66 = vmatprep.subr.mxu0 0.0
  %67 = vmatpush2.msra.mxu0 0.0
  %68 = vmatprep.subr.mxu0 0.0
  %69 = vmatpush2.msra.mxu0 0.0
  %70 = vmatprep.subr.mxu0 0.0
  %71 = vmatpush2.msra.mxu0 0.0
  %72 = vmatprep.subr.mxu0 0.0
  %73 = vmatpush2.msra.mxu0 0.0
  %74 = vmatprep.subr.mxu0 0.0
  %75 = vmatpush2.msra.mxu0 0.0
  %76 = vmatprep.subr.mxu0 0.0
  %77 = vmatpush2.msra.mxu0 0.0
  %78 = vmatprep.subr.mxu0 0.0
  %79 = vmatpush2.msra.mxu0 0.0
  %80 = vmatprep.subr.mxu0 0.0
  %81 = vmatpush2.msra.mxu0 0.0
  %82 = vmatprep.subr.mxu0 0.0
  %83 = vmatpush2.msra.mxu0 0.0
  %84 = vmatprep.subr.mxu0 0.0
  %85 = vmatpush2.msra.mxu0 0.0
  %86 = vmatprep.subr.mxu0 0.0
  %87 = vmatpush2.msra.mxu0 0.0
  %88 = vmatprep.subr.mxu0 0.0
  %89 = vmatpush2.msra.mxu0 0.0
  %90 = vmatprep.subr.mxu0 0.0
  %91 = vmatpush2.msra.mxu0 0.0
  %92 = vmatprep.subr.mxu0 0.0
  %93 = vmatpush2.msra.mxu0 0.0
  %94 = vmatprep.mubr.f32.mxu0 0.0
  %95 = vmatmul.mubr.f32.gmra.mxu0 %v25
  %v96 = vpop.f32.mrf.mxu0
  %v97 = vadd.f32 0.0, %v96
  %v98 = vpop.f32.mrf.mxu0
  %99 = vmatprep.mubr.f32.mxu0 0.0
  %100 = vmatmul.mubr.f32.gmra.mxu0 %v28
  %v101 = vpop.f32.mrf.mxu0
  %v102 = vadd.f32 0.0, %v101
  %v103 = vpop.f32.mrf.mxu0
  %104 = vdwg.mxu0
  %v105 = vadd.f32 %v18, %v97
  %v106 = vadd.f32 %v19, %v102
  %vm107 = vcmask 261120
  %108 = vst.msk [vmem:[#allocation2] sm:$0xff] %vm107, %v105
  %109 = vst.msk [vmem:[#allocation2 + $0x8] sm:$0xff] %vm107, %v106
  // Predicated region
  $region14: #{decoder_layer.20} parent=0 // pred_check
    %p110 = pneg %p11
  $region15: #{decoder_layer.20} parent=0 // pred_check_branch
    %112 = sbr.rel (%p110) target = $region17
  $region16: #{decoder_layer.20} parent=0 // pred_region
    %v113 = vld [vmem:[#allocation2] sm:$0xff]
    %v114 = vld [vmem:[#allocation2 + $0x8] sm:$0xff]
    %115 = vst.msk [vmem:[%s2] sm:$0xff] %vm107, %v113
    %116 = vst.msk [vmem:[%s2 + $0x8] sm:$0xff] %vm107, %v114
  $region17: #{decoder_layer.20} parent=0 // pred_fallthru
    _
  // Predicated region
  $region18: #{decoder_layer.20} parent=0 // pred_check
    _
  $region19: #{decoder_layer.20} parent=0 // pred_check_branch
    %118 = sbr.rel (0) target = $region21
  $region20: #{decoder_layer.20} parent=0 // pred_region
    _
  $region21: #{decoder_layer.20} parent=0 // pred_fallthru
    _
  // Predicated region
  $region22: #{decoder_layer.20} parent=0 // pred_check
    _
  $region23: #{decoder_layer.20} parent=0 // pred_check_branch
    %120 = sbr.rel (0) target = $region25
  $region24: #{decoder_layer.20} parent=0 // pred_region
    _
  $region25: #{decoder_layer.20} parent=0 // pred_fallthru
    _

// kernel: decoder_layer.22
$region0: #{decoder_layer.22}
  #allocation0 [shape = 'u32[]', space=smem, size = 0x4, offset = 0x4, fixed_abs, tag = 'smem constant byte address 0x4 - core index']
  #allocation1 [shape = 'u32[144,128]{1,0:T(1,128)}', space=vmem, size = 0x12000, scoped, tag = 'internal scratch']
  #allocation2 [shape = 'f32[16,16]{1,0:T(8,128)}', space=vmem, size = 0x2000, scoped, tag = 'scratch operand']
  %s0 = inlined_call_operand.vmem [shape: f32[16,32], index: 0, kind: input, shape index: {}]
  %s1 = inlined_call_operand.vmem [shape: f32[32,16], index: 1, kind: input, shape index: {}]
  %s2 = inlined_call_operand.vmem [shape: f32[16,16], index: 2, kind: output, shape index: {}]
  %s3 = sld [smem:[#allocation0]]
  $region26: #{decoder_layer.22} parent=0
    _
  %s5 = ssub.s32 1, %s3
  %s6 = scalar_select 0, %s5, %s3
  // Predicated region
  $region2: #{decoder_layer.22} parent=0 // pred_check
    _
  $region3: #{decoder_layer.22} parent=0 // pred_check_branch
    %8 = sbr.rel (0) target = $region5
  $region4: #{decoder_layer.22} parent=0 // pred_region
    _
  $region5: #{decoder_layer.22} parent=0 // pred_fallthru
    _
  // Predicated region
  $region6: #{decoder_layer.22} parent=0 // pred_check
    _
  $region7: #{decoder_layer.22} parent=0 // pred_check_branch
    %10 = sbr.rel (0) target = $region9
  $region8: #{decoder_layer.22} parent=0 // pred_region
    _
  $region9: #{decoder_layer.22} parent=0 // pred_fallthru
    _
  %p11 = scmp.eq.s32.totalorder 0, 0
  // Predicated region
  $region10: #{decoder_layer.22} parent=0 // pred_check
    %p12 = pneg %p11
  $region11: #{decoder_layer.22} parent=0 // pred_check_branch
    %14 = sbr.rel (%p12) target = $region13
  $region12: #{decoder_layer.22} parent=0 // pred_region
    %vm15 = vcmask 130048
    %16 = vst.msk [vmem:[#allocation2] sm:$0xff] %vm15, 0.0
    %17 = vst.msk [vmem:[#allocation2 + $0x8] sm:$0xff] %vm15, 0.0
  $region13: #{decoder_layer.22} parent=0 // pred_fallthru
    _
  %v18 = vld [vmem:[#allocation2] sm:$0xff]
  %v19 = vld [vmem:[#allocation2 + $0x8] sm:$0xff]
  %v20 = vld [vmem:[%s0] sm:$0xff]
  %v21 = vld [vmem:[%s0 + $0x8] sm:$0xff]
  %v22 = vld [vmem:[%s1] sm:$0xff]
  %v23 = vld [vmem:[%s1 + $0x8] sm:$0xff]
  %v24 = vld [vmem:[%s1 + $0x10] sm:$0xff]
  %v25 = vld [vmem:[%s1 + $0x18] sm:$0xff]
  %vm26 = vcmask 261120
  %v28 = vsel %vm26, %v20, 0
  %v31 = vsel %vm26, %v21, 0
  %33 = vmatprep.subr.mxu0 0.0
  %34 = vmatpush1.msra.mxu0 0.0
  %35 = vmatprep.subr.mxu0 0.0
  %36 = vmatpush1.msra.mxu0 0.0
  %37 = vmatprep.subr.mxu0 0.0
  %38 = vmatpush1.msra.mxu0 0.0
  %39 = vmatprep.subr.mxu0 0.0
  %40 = vmatpush1.msra.mxu0 0.0
  %41 = vmatprep.subr.mxu0 0.0
  %42 = vmatpush1.msra.mxu0 0.0
  %43 = vmatprep.subr.mxu0 0.0
  %44 = vmatpush1.msra.mxu0 0.0
  %45 = vmatprep.subr.mxu0 0.0
  %46 = vmatpush1.msra.mxu0 0.0
  %47 = vmatprep.subr.mxu0 0.0
  %48 = vmatpush1.msra.mxu0 0.0
  %49 = vmatprep.subr.mxu0 0.0
  %50 = vmatpush1.msra.mxu0 0.0
  %51 = vmatprep.subr.mxu0 0.0
  %52 = vmatpush1.msra.mxu0 0.0
  %53 = vmatprep.subr.mxu0 0.0
  %54 = vmatpush1.msra.mxu0 0.0
  %55 = vmatprep.subr.mxu0 0.0
  %56 = vmatpush1.msra.mxu0 0.0
  %57 = vmatprep.subr.mxu0 0.0
  %58 = vmatpush1.msra.mxu0 %v25
  %59 = vmatprep.subr.mxu0 0.0
  %60 = vmatpush1.msra.mxu0 %v24
  %61 = vmatprep.subr.mxu0 0.0
  %62 = vmatpush1.msra.mxu0 %v23
  %63 = vmatprep.subr.mxu0 0.0
  %64 = vmatpush1.msra.mxu0 %v22
  %65 = vmatprep.subr.mxu0 0.0
  %66 = vmatpush2.msra.mxu0 0.0
  %67 = vmatprep.subr.mxu0 0.0
  %68 = vmatpush2.msra.mxu0 0.0
  %69 = vmatprep.subr.mxu0 0.0
  %70 = vmatpush2.msra.mxu0 0.0
  %71 = vmatprep.subr.mxu0 0.0
  %72 = vmatpush2.msra.mxu0 0.0
  %73 = vmatprep.subr.mxu0 0.0
  %74 = vmatpush2.msra.mxu0 0.0
  %75 = vmatprep.subr.mxu0 0.0
  %76 = vmatpush2.msra.mxu0 0.0
  %77 = vmatprep.subr.mxu0 0.0
  %78 = vmatpush2.msra.mxu0 0.0
  %79 = vmatprep.subr.mxu0 0.0
  %80 = vmatpush2.msra.mxu0 0.0
  %81 = vmatprep.subr.mxu0 0.0
  %82 = vmatpush2.msra.mxu0 0.0
  %83 = vmatprep.subr.mxu0 0.0
  %84 = vmatpush2.msra.mxu0 0.0
  %85 = vmatprep.subr.mxu0 0.0
  %86 = vmatpush2.msra.mxu0 0.0
  %87 = vmatprep.subr.mxu0 0.0
  %88 = vmatpush2.msra.mxu0 0.0
  %89 = vmatprep.subr.mxu0 0.0
  %90 = vmatpush2.msra.mxu0 0.0
  %91 = vmatprep.subr.mxu0 0.0
  %92 = vmatpush2.msra.mxu0 0.0
  %93 = vmatprep.subr.mxu0 0.0
  %94 = vmatpush2.msra.mxu0 0.0
  %95 = vmatprep.subr.mxu0 0.0
  %96 = vmatpush2.msra.mxu0 0.0
  %97 = vmatprep.mubr.f32.mxu0 0.0
  %98 = vmatmul.mubr.f32.gmra.mxu0 %v28
  %v99 = vpop.f32.mrf.mxu0
  %v100 = vadd.f32 0.0, %v99
  %v101 = vpop.f32.mrf.mxu0
  %102 = vmatprep.mubr.f32.mxu0 0.0
  %103 = vmatmul.mubr.f32.gmra.mxu0 %v31
  %v104 = vpop.f32.mrf.mxu0
  %v105 = vadd.f32 0.0, %v104
  %v106 = vpop.f32.mrf.mxu0
  %107 = vdwg.mxu0
  %v108 = vadd.f32 %v18, %v100
  %v109 = vadd.f32 %v19, %v105
  %vm110 = vcmask 130048
  %111 = vst.msk [vmem:[#allocation2] sm:$0xff] %vm110, %v108
  %112 = vst.msk [vmem:[#allocation2 + $0x8] sm:$0xff] %vm110, %v109
  // Predicated region
  $region14: #{decoder_layer.22} parent=0 // pred_check
    %p113 = pneg %p11
  $region15: #{decoder_layer.22} parent=0 // pred_check_branch
    %115 = sbr.rel (%p113) target = $region17
  $region16: #{decoder_layer.22} parent=0 // pred_region
    %v116 = vld [vmem:[#allocation2] sm:$0xff]
    %v117 = vld [vmem:[#allocation2 + $0x8] sm:$0xff]
    %118 = vst.msk [vmem:[%s2] sm:$0xff] %vm110, %v116
    %119 = vst.msk [vmem:[%s2 + $0x8] sm:$0xff] %vm110, %v117
  $region17: #{decoder_layer.22} parent=0 // pred_fallthru
    _
  // Predicated region
  $region18: #{decoder_layer.22} parent=0 // pred_check
    _
  $region19: #{decoder_layer.22} parent=0 // pred_check_branch
    %121 = sbr.rel (0) target = $region21
  $region20: #{decoder_layer.22} parent=0 // pred_region
    _
  $region21: #{decoder_layer.22} parent=0 // pred_fallthru
    _
  // Predicated region
  $region22: #{decoder_layer.22} parent=0 // pred_check
    _
  $region23: #{decoder_layer.22} parent=0 // pred_check_branch
    %123 = sbr.rel (0) target = $region25
  $region24: #{decoder_layer.22} parent=0 // pred_region
    _
  $region25: #{decoder_layer.22} parent=0 // pred_fallthru
    _

// kernel: decoder_layer.24
$region0: #{decoder_layer.24}
  #allocation0 [shape = 'u32[]', space=smem, size = 0x4, offset = 0x4, fixed_abs, tag = 'smem constant byte address 0x4 - core index']
  #allocation1 [shape = 'u32[144,128]{1,0:T(1,128)}', space=vmem, size = 0x12000, scoped, tag = 'internal scratch']
  %s0 = inlined_call_operand.vmem [shape: f32[32,8,3], index: 0, kind: input, shape index: {}]
  %s1 = inlined_call_operand.vmem [shape: f32[32,8,3], index: 1, kind: input, shape index: {}]
  %s2 = inlined_call_operand.vmem [shape: f32[32,8,2], index: 2, kind: input, shape index: {}]
  %s3 = inlined_call_operand.vmem [shape: f32[32,8,2], index: 3, kind: output, shape index: {}]
  %s4 = sld [smem:[#allocation0]]
  $region45: #{decoder_layer.24} parent=0
    _
  %s6 = ssub.s32 1, %s4
  %s7 = scalar_select 0, %s6, %s4
  loop: start=0, step=1, limit=34
  $region2: #{decoder_layer.24} parent=0 // loop_pre_header
    _
  $region3: #{decoder_layer.24} parent=0 // loop_header
    %s9 = sphi 0, %s13
    %p10 = scmp.ge.s32.totalorder %s9, 34
    %s19 = sphi 0, %s21
    %s22 = sphi 0, %s19
    %s23 = sphi 0, %s22
    %s39 = sphi 0, %s23
    %s45 = sphi 0, %s47
    %s48 = sphi 0, %s45
    %s49 = sphi 0, %s48
    %s65 = sphi 0, %s49
    %s71 = sphi 0, %s73
    %s74 = sphi 0, %s71
    %s75 = sphi 0, %s74
    %s91 = sphi 0, %s75
    %s97 = sphi 0, %s99
    %s100 = sphi 0, %s97
    %s101 = sphi 0, %s100
    %s117 = sphi 0, %s101
  $region4: #{decoder_layer.24} parent=0 // loop_header_branch
    %12 = sbr.rel (%p10) target = $region8
  $region5: #{decoder_layer.24} parent=0 // loop_body
    %s14 = ssub.s32 %s9, 1
    %s15 = ssub.s32 %s9, 2
    %s16 = sadd.s32 %s9, 1
    %s17 = ssub.s32 %s9, %s16
    %p18 = scmp.eq.s32.totalorder %s17, 0
    %s20 = sadd.s32 %s19, 1
    %s21 = scalar_select %p18, %s19, %s20
    %p24 = pneg %p18
    %p25 = scmp.eq.s32.totalorder %s9, 31
    %p26 = por %p24, %p25
    %p27 = scmp.ne.s32.totalorder %s19, %s22
    %p28 = scmp.eq.s32.totalorder %s9, 0
    %p29 = por %p27, %p28
    %p30 = scmp.ne.s32.totalorder %s19, %s22
    %p31 = scmp.eq.s32.totalorder %s14, 31
    %p32 = por %p30, %p31
    %p33 = scmp.ne.s32.totalorder %s22, %s23
    %p34 = scmp.eq.s32.totalorder %s14, 0
    %p35 = por %p33, %p34
    %p36 = scmp.ne.s32.totalorder %s22, %s23
    %p37 = scmp.eq.s32.totalorder %s15, 31
    %p38 = por %p36, %p37
    %p40 = scmp.ne.s32.totalorder %s23, %s39
    %p41 = scmp.eq.s32.totalorder %s15, 0
    %p42 = por %p40, %p41
    %s43 = ssub.s32 %s9, %s16
    %p44 = scmp.eq.s32.totalorder %s43, 0
    %s46 = sadd.s32 %s45, 1
    %s47 = scalar_select %p44, %s45, %s46
    %p50 = pneg %p44
    %p51 = scmp.eq.s32.totalorder %s9, 31
    %p52 = por %p50, %p51
    %p53 = scmp.ne.s32.totalorder %s45, %s48
    %p54 = scmp.eq.s32.totalorder %s9, 0
    %p55 = por %p53, %p54
    %p56 = scmp.ne.s32.totalorder %s45, %s48
    %p57 = scmp.eq.s32.totalorder %s14, 31
    %p58 = por %p56, %p57
    %p59 = scmp.ne.s32.totalorder %s48, %s49
    %p60 = scmp.eq.s32.totalorder %s14, 0
    %p61 = por %p59, %p60
    %p62 = scmp.ne.s32.totalorder %s48, %s49
    %p63 = scmp.eq.s32.totalorder %s15, 31
    %p64 = por %p62, %p63
    %p66 = scmp.ne.s32.totalorder %s49, %s65
    %p67 = scmp.eq.s32.totalorder %s15, 0
    %p68 = por %p66, %p67
    %s69 = ssub.s32 %s9, %s16
    %p70 = scmp.eq.s32.totalorder %s69, 0
    %s72 = sadd.s32 %s71, 1
    %s73 = scalar_select %p70, %s71, %s72
    %p76 = pneg %p70
    %p77 = scmp.eq.s32.totalorder %s9, 31
    %p78 = por %p76, %p77
    %p79 = scmp.ne.s32.totalorder %s71, %s74
    %p80 = scmp.eq.s32.totalorder %s9, 0
    %p81 = por %p79, %p80
    %p82 = scmp.ne.s32.totalorder %s71, %s74
    %p83 = scmp.eq.s32.totalorder %s14, 31
    %p84 = por %p82, %p83
    %p85 = scmp.ne.s32.totalorder %s74, %s75
    %p86 = scmp.eq.s32.totalorder %s14, 0
    %p87 = por %p85, %p86
    %p88 = scmp.ne.s32.totalorder %s74, %s75
    %p89 = scmp.eq.s32.totalorder %s15, 31
    %p90 = por %p88, %p89
    %p92 = scmp.ne.s32.totalorder %s75, %s91
    %p93 = scmp.eq.s32.totalorder %s15, 0
    %p94 = por %p92, %p93
    %s95 = ssub.s32 %s9, %s16
    %p96 = scmp.eq.s32.totalorder %s95, 0
    %s98 = sadd.s32 %s97, 1
    %s99 = scalar_select %p96, %s97, %s98
    %p102 = pneg %p96
    %p103 = scmp.eq.s32.totalorder %s9, 31
    %p104 = por %p102, %p103
    %p105 = scmp.ne.s32.totalorder %s97, %s100
    %p106 = scmp.eq.s32.totalorder %s9, 0
    %p107 = por %p105, %p106
    %p108 = scmp.ne.s32.totalorder %s97, %s100
    %p109 = scmp.eq.s32.totalorder %s14, 31
    %p110 = por %p108, %p109
    %p111 = scmp.ne.s32.totalorder %s100, %s101
    %p112 = scmp.eq.s32.totalorder %s14, 0
    %p113 = por %p111, %p112
    %p114 = scmp.ne.s32.totalorder %s100, %s101
    %p115 = scmp.eq.s32.totalorder %s15, 31
    %p116 = por %p114, %p115
    %p118 = scmp.ne.s32.totalorder %s101, %s117
    %p119 = scmp.eq.s32.totalorder %s15, 0
    %p120 = por %p118, %p119
    %p121 = scmp.le.s32.totalorder 1, %s9
    %p122 = scmp.lt.s32.totalorder %s9, 33
    %p123 = pnand %p121, %p122
    %p124 = pneg %p123
    // Predicated region
    $region9: #{decoder_layer.24} parent=5 // pred_check
      _
    $region10: #{decoder_layer.24} parent=5 // pred_check_branch
      %126 = sbr.rel (%p123) target = $region12
    $region11: #{decoder_layer.24} parent=5 // pred_region
      %s127 = ssub.s32 %s9, 1
    $region12: #{decoder_layer.24} parent=5 // pred_fallthru
      _
    %p128 = scmp.lt.s32.totalorder %s9, 32
    // Predicated region
    $region13: #{decoder_layer.24} parent=5 // pred_check
      %p129 = pneg %p128
    $region14: #{decoder_layer.24} parent=5 // pred_check_branch
      %131 = sbr.rel (%p129) target = $region16
    $region15: #{decoder_layer.24} parent=5 // pred_region
      // Predicated region
      $region17: #{decoder_layer.24} parent=15 // pred_check
        %p132 = pneg %p29
      $region18: #{decoder_layer.24} parent=15 // pred_check_branch
        %134 = sbr.rel (%p132) target = $region20
      $region19: #{decoder_layer.24} parent=15 // pred_region
        %p135 = scmp.lt.s32.totalorder %s9, 31
        %s136 = scalar_select %p135, %s9, 31
        %s137 = smul.addr %s136, 8
        %s138 = scalar_lea.vmem %s0, %s137
      $region20: #{decoder_layer.24} parent=15 // pred_fallthru
        _
      // Predicated region
      $region21: #{decoder_layer.24} parent=15 // pred_check
        %p139 = pneg %p55
      $region22: #{decoder_layer.24} parent=15 // pred_check_branch
        %141 = sbr.rel (%p139) target = $region24
      $region23: #{decoder_layer.24} parent=15 // pred_region
        %p142 = scmp.lt.s32.totalorder %s9, 31
        %s143 = scalar_select %p142, %s9, 31
        %s144 = smul.addr %s143, 8
        %s145 = scalar_lea.vmem %s1, %s144
      $region24: #{decoder_layer.24} parent=15 // pred_fallthru
        _
      // Predicated region
      $region25: #{decoder_layer.24} parent=15 // pred_check
        %p146 = pneg %p81
      $region26: #{decoder_layer.24} parent=15 // pred_check_branch
        %148 = sbr.rel (%p146) target = $region28
      $region27: #{decoder_layer.24} parent=15 // pred_region
        %p149 = scmp.lt.s32.totalorder %s9, 31
        %s150 = scalar_select %p149, %s9, 31
        %s151 = smul.addr %s150, 8
        %s152 = scalar_lea.vmem %s2, %s151
      $region28: #{decoder_layer.24} parent=15 // pred_fallthru
        _
    $region16: #{decoder_layer.24} parent=5 // pred_fallthru
      _
    %p153 = scmp.le.s32.totalorder 1, %s9
    %p154 = scmp.lt.s32.totalorder %s9, 33
    %p155 = pnand %p153, %p154
    %p156 = pneg %p155
    // Predicated region
    $region29: #{decoder_layer.24} parent=5 // pred_check
      _
    $region30: #{decoder_layer.24} parent=5 // pred_check_branch
      %158 = sbr.rel (%p155) target = $region32
    $region31: #{decoder_layer.24} parent=5 // pred_region
      %s159 = ssub.s32 %s9, 1
      %p160 = scmp.lt.s32.totalorder %s14, 31
      %s161 = scalar_select %p160, %s14, 31
      %s162 = smul.addr %s161, 8
      %s163 = scalar_lea.vmem %s0, %s162
      %p164 = pneg %p35
      %p165 = pneg %p32
      %p166 = scmp.lt.s32.totalorder %s14, 31
      %s167 = scalar_select %p166, %s14, 31
      %s168 = smul.addr %s167, 8
      %s169 = scalar_lea.vmem %s1, %s168
      %p170 = pneg %p61
      %p171 = pneg %p58
      %p172 = scmp.lt.s32.totalorder %s14, 31
      %s173 = scalar_select %p172, %s14, 31
      %s174 = smul.addr %s173, 8
      %s175 = scalar_lea.vmem %s2, %s174
      %p176 = pneg %p87
      %p177 = pneg %p84
      %p178 = pneg %p113
      %p179 = pneg %p110
      %p180 = scmp.lt.s32.totalorder %s14, 31
      %s181 = scalar_select %p180, %s14, 31
      %s182 = smul.addr %s181, 8
      %s183 = scalar_lea.vmem %s3, %s182
      %p184 = scmp.lt.s32.totalorder %s14, 31
      %s185 = scalar_select %p184, %s14, 31
      %s186 = smul.addr %s185, 8
      %s187 = scalar_lea.vmem %s0, %s186
      %p188 = scmp.lt.s32.totalorder %s14, 31
      %s189 = scalar_select %p188, %s14, 31
      %s190 = smul.addr %s189, 8
      %s191 = scalar_lea.vmem %s1, %s190
      %p192 = scmp.lt.s32.totalorder %s14, 31
      %s193 = scalar_select %p192, %s14, 31
      %s194 = smul.addr %s193, 8
      %s195 = scalar_lea.vmem %s2, %s194
      %p196 = scmp.lt.s32.totalorder %s14, 31
      %s197 = scalar_select %p196, %s14, 31
      %s198 = smul.addr %s197, 8
      %s199 = scalar_lea.vmem %s3, %s198
      %v200 = vld [vmem:[%s187] sm:$0xff]
      %v201 = vld [vmem:[%s191] sm:$0xff]
      %v202 = vld [vmem:[%s195] sm:$0xff]
      %vm203 = vcmask 23552
      %v205 = vsel %vm203, %v200, 0
      %v208 = vsel %vm203, %v201, 0
      %210 = vmatprep.subr.mxu0 0.0
      %211 = vmatpush1.xpose.msra.mxu0 0.0
      %212 = vmatprep.subr.mxu0 0.0
      %213 = vmatpush1.xpose.msra.mxu0 0.0
      %214 = vmatprep.subr.mxu0 0.0
      %215 = vmatpush1.xpose.msra.mxu0 0.0
      %216 = vmatprep.subr.mxu0 0.0
      %217 = vmatpush1.xpose.msra.mxu0 0.0
      %218 = vmatprep.subr.mxu0 0.0
      %219 = vmatpush1.xpose.msra.mxu0 0.0
      %220 = vmatprep.subr.mxu0 0.0
      %221 = vmatpush1.xpose.msra.mxu0 0.0
      %222 = vmatprep.subr.mxu0 0.0
      %223 = vmatpush1.xpose.msra.mxu0 0.0
      %224 = vmatprep.subr.mxu0 0.0
      %225 = vmatpush1.xpose.msra.mxu0 0.0
      %226 = vmatprep.subr.mxu0 0.0
      %227 = vmatpush1.xpose.msra.mxu0 0.0
      %228 = vmatprep.subr.mxu0 0.0
      %229 = vmatpush1.xpose.msra.mxu0 0.0
      %230 = vmatprep.subr.mxu0 0.0
      %231 = vmatpush1.xpose.msra.mxu0 0.0
      %232 = vmatprep.subr.mxu0 0.0
      %233 = vmatpush1.xpose.msra.mxu0 0.0
      %234 = vmatprep.subr.mxu0 0.0
      %235 = vmatpush1.xpose.msra.mxu0 0.0
      %236 = vmatprep.subr.mxu0 0.0
      %237 = vmatpush1.xpose.msra.mxu0 0.0
      %238 = vmatprep.subr.mxu0 0.0
      %239 = vmatpush1.xpose.msra.mxu0 0.0
      %240 = vmatprep.subr.mxu0 0.0
      %241 = vmatpush1.xpose.msra.mxu0 %v208
      %242 = vmatprep.subr.mxu0 0.0
      %243 = vmatpush2.xpose.msra.mxu0 0.0
      %244 = vmatprep.subr.mxu0 0.0
      %245 = vmatpush2.xpose.msra.mxu0 0.0
      %246 = vmatprep.subr.mxu0 0.0
      %247 = vmatpush2.xpose.msra.mxu0 0.0
      %248 = vmatprep.subr.mxu0 0.0
      %249 = vmatpush2.xpose.msra.mxu0 0.0
      %250 = vmatprep.subr.mxu0 0.0
      %251 = vmatpush2.xpose.msra.mxu0 0.0
      %252 = vmatprep.subr.mxu0 0.0
      %253 = vmatpush2.xpose.msra.mxu0 0.0
      %254 = vmatprep.subr.mxu0 0.0
      %255 = vmatpush2.xpose.msra.mxu0 0.0
      %256 = vmatprep.subr.mxu0 0.0
      %257 = vmatpush2.xpose.msra.mxu0 0.0
      %258 = vmatprep.subr.mxu0 0.0
      %259 = vmatpush2.xpose.msra.mxu0 0.0
      %260 = vmatprep.subr.mxu0 0.0
      %261 = vmatpush2.xpose.msra.mxu0 0.0
      %262 = vmatprep.subr.mxu0 0.0
      %263 = vmatpush2.xpose.msra.mxu0 0.0
      %264 = vmatprep.subr.mxu0 0.0
      %265 = vmatpush2.xpose.msra.mxu0 0.0
      %266 = vmatprep.subr.mxu0 0.0
      %267 = vmatpush2.xpose.msra.mxu0 0.0
      %268 = vmatprep.subr.mxu0 0.0
      %269 = vmatpush2.xpose.msra.mxu0 0.0
      %270 = vmatprep.subr.mxu0 0.0
      %271 = vmatpush2.xpose.msra.mxu0 0.0
      %272 = vmatprep.subr.mxu0 0.0
      %273 = vmatpush2.xpose.msra.mxu0 0.0
      %274 = vmatprep.mubr.f32.mxu0 0.0
      %275 = vmatmul.mubr.f32.gmra.mxu0 %v205
      %v276 = vpop.f32.mrf.mxu0
      %v277 = vadd.f32 0.0, %v276
      %v278 = vpop.f32.mrf.mxu0
      %279 = vdwg.mxu0
      %v280 = vmul.f32 %v277, 0.57735026
      %vm281 = vcmask 64512
      %v282 = vsel %vm281, %v280, -inf
      %283 = vmax.xlane.f32.xlu0 %v282
      %v284 = vpop.xlane.xlu0 %283
      %v285 = vsub.f32 %v280, %v284
      %v286 = vmul.f32 %v285, 1.442695
      %v287 = vpow.pop %v286
      %v289 = vsel %vm281, %v287, 0
      %291 = vmatprep.subr.mxu0 0.0
      %292 = vmatpush1.msra.mxu0 0.0
      %293 = vmatprep.subr.mxu0 0.0
      %294 = vmatpush1.msra.mxu0 0.0
      %295 = vmatprep.subr.mxu0 0.0
      %296 = vmatpush1.msra.mxu0 0.0
      %297 = vmatprep.subr.mxu0 0.0
      %298 = vmatpush1.msra.mxu0 0.0
      %299 = vmatprep.subr.mxu0 0.0
      %300 = vmatpush1.msra.mxu0 0.0
      %301 = vmatprep.subr.mxu0 0.0
      %302 = vmatpush1.msra.mxu0 0.0
      %303 = vmatprep.subr.mxu0 0.0
      %304 = vmatpush1.msra.mxu0 0.0
      %305 = vmatprep.subr.mxu0 0.0
      %306 = vmatpush1.msra.mxu0 0.0
      %307 = vmatprep.subr.mxu0 0.0
      %308 = vmatpush1.msra.mxu0 0.0
      %309 = vmatprep.subr.mxu0 0.0
      %310 = vmatpush1.msra.mxu0 0.0
      %311 = vmatprep.subr.mxu0 0.0
      %312 = vmatpush1.msra.mxu0 0.0
      %313 = vmatprep.subr.mxu0 0.0
      %314 = vmatpush1.msra.mxu0 0.0
      %315 = vmatprep.subr.mxu0 0.0
      %316 = vmatpush1.msra.mxu0 0.0
      %317 = vmatprep.subr.mxu0 0.0
      %318 = vmatpush1.msra.mxu0 0.0
      %319 = vmatprep.subr.mxu0 0.0
      %320 = vmatpush1.msra.mxu0 0.0
      %321 = vmatprep.subr.mxu0 0.0
      %322 = vmatpush1.msra.mxu0 %v202
      %323 = vmatprep.subr.mxu0 0.0
      %324 = vmatpush2.msra.mxu0 0.0
      %325 = vmatprep.subr.mxu0 0.0
      %326 = vmatpush2.msra.mxu0 0.0
      %327 = vmatprep.subr.mxu0 0.0
      %328 = vmatpush2.msra.mxu0 0.0
      %329 = vmatprep.subr.mxu0 0.0
      %330 = vmatpush2.msra.mxu0 0.0
      %331 = vmatprep.subr.mxu0 0.0
      %332 = vmatpush2.msra.mxu0 0.0
      %333 = vmatprep.subr.mxu0 0.0
      %334 = vmatpush2.msra.mxu0 0.0
      %335 = vmatprep.subr.mxu0 0.0
      %336 = vmatpush2.msra.mxu0 0.0
      %337 = vmatprep.subr.mxu0 0.0
      %338 = vmatpush2.msra.mxu0 0.0
      %339 = vmatprep.subr.mxu0 0.0
      %340 = vmatpush2.msra.mxu0 0.0
      %341 = vmatprep.subr.mxu0 0.0
      %342 = vmatpush2.msra.mxu0 0.0
      %343 = vmatprep.subr.mxu0 0.0
      %344 = vmatpush2.msra.mxu0 0.0
      %345 = vmatprep.subr.mxu0 0.0
      %346 = vmatpush2.msra.mxu0 0.0
      %347 = vmatprep.subr.mxu0 0.0
      %348 = vmatpush2.msra.mxu0 0.0
      %349 = vmatprep.subr.mxu0 0.0
      %350 = vmatpush2.msra.mxu0 0.0
      %351 = vmatprep.subr.mxu0 0.0
      %352 = vmatpush2.msra.mxu0 0.0
      %353 = vmatprep.subr.mxu0 0.0
      %354 = vmatpush2.msra.mxu0 0.0
      %355 = vmatprep.mubr.f32.mxu0 0.0
      %356 = vmatmul.mubr.f32.gmra.mxu0 %v289
      %v357 = vpop.f32.mrf.mxu0
      %v358 = vadd.f32 0.0, %v357
      %v359 = vpop.f32.mrf.mxu0
      %360 = vdwg.mxu0
      %v361 = vsel %vm281, %v287, 0.0
      %362 = vadd.xlane.f32.xlu0 %v361
      %v363 = vpop.xlane.xlu0 %362
      %v364 = vrcp.pop %v363
      %v365 = vmul.f32 %v358, %v364
      %vm366 = vcmask 15360
      %367 = vst.msk [vmem:[%s199] sm:$0xff] %vm366, %v365
      %p368 = scmp.lt.s32.totalorder %s14, 31
      %s369 = scalar_select %p368, %s14, 31
      %s370 = smul.addr %s369, 8
      %s371 = scalar_lea.vmem %s3, %s370
      // Predicated region
      $region33: #{decoder_layer.24} parent=31 // pred_check
        %p372 = pneg %p110
      $region34: #{decoder_layer.24} parent=31 // pred_check_branch
        %374 = sbr.rel (%p372) target = $region36
      $region35: #{decoder_layer.24} parent=31 // pred_region
        _
      $region36: #{decoder_layer.24} parent=31 // pred_fallthru
        _
    $region32: #{decoder_layer.24} parent=5 // pred_fallthru
      _
    %p375 = scmp.le.s32.totalorder 2, %s9
    // Predicated region
    $region37: #{decoder_layer.24} parent=5 // pred_check
      %p376 = pneg %p375
    $region38: #{decoder_layer.24} parent=5 // pred_check_branch
      %378 = sbr.rel (%p376) target = $region40
    $region39: #{decoder_layer.24} parent=5 // pred_region
      %s379 = ssub.s32 %s9, 2
      // Predicated region
      $region41: #{decoder_layer.24} parent=39 // pred_check
        %p380 = pneg %p116
      $region42: #{decoder_layer.24} parent=39 // pred_check_branch
        %382 = sbr.rel (%p380) target = $region44
      $region43: #{decoder_layer.24} parent=39 // pred_region
        %p383 = scmp.lt.s32.totalorder %s15, 31
        %s384 = scalar_select %p383, %s15, 31
        %s385 = smul.addr %s384, 8
        %s386 = scalar_lea.vmem %s3, %s385
      $region44: #{decoder_layer.24} parent=39 // pred_fallthru
        _
    $region40: #{decoder_layer.24} parent=5 // pred_fallthru
      _
  $region6: #{decoder_layer.24} parent=0 // loop_footer
    %s13 = sadd.s32 1, %s9
  $region7: #{decoder_layer.24} parent=0 // loop_footer_branch
    %8 = sbr.rel target = $region3
  $region8: #{decoder_layer.24} parent=0 // loop_exit
    _

// kernel: decoder_layer.25
$region0: #{decoder_layer.25}
  #allocation0 [shape = 'u32[]', space=smem, size = 0x4, offset = 0x4, fixed_abs, tag = 'smem constant byte address 0x4 - core index']
  #allocation1 [shape = 'u32[144,128]{1,0:T(1,128)}', space=vmem, size = 0x12000, scoped, tag = 'internal scratch']
  #allocation2 [shape = 'f32[16,32]{1,0:T(8,128)}', space=vmem, size = 0x2000, scoped, tag = 'scratch operand']
  %s0 = inlined_call_operand.vmem [shape: f32[16,32], index: 0, kind: input, shape index: {}]
  %s1 = inlined_call_operand.vmem [shape: f32[32,32], index: 1, kind: input, shape index: {}]
  %s2 = inlined_call_operand.vmem [shape: f32[16,32], index: 2, kind: output, shape index: {}]
  %s3 = sld [smem:[#allocation0]]
  $region26: #{decoder_layer.25} parent=0
    _
  %s5 = ssub.s32 1, %s3
  %s6 = scalar_select 0, %s5, %s3
  // Predicated region
  $region2: #{decoder_layer.25} parent=0 // pred_check
    _
  $region3: #{decoder_layer.25} parent=0 // pred_check_branch
    %8 = sbr.rel (0) target = $region5
  $region4: #{decoder_layer.25} parent=0 // pred_region
    _
  $region5: #{decoder_layer.25} parent=0 // pred_fallthru
    _
  // Predicated region
  $region6: #{decoder_layer.25} parent=0 // pred_check
    _
  $region7: #{decoder_layer.25} parent=0 // pred_check_branch
    %10 = sbr.rel (0) target = $region9
  $region8: #{decoder_layer.25} parent=0 // pred_region
    _
  $region9: #{decoder_layer.25} parent=0 // pred_fallthru
    _
  %p11 = scmp.eq.s32.totalorder 0, 0
  // Predicated region
  $region10: #{decoder_layer.25} parent=0 // pred_check
    %p12 = pneg %p11
  $region11: #{decoder_layer.25} parent=0 // pred_check_branch
    %14 = sbr.rel (%p12) target = $region13
  $region12: #{decoder_layer.25} parent=0 // pred_region
    %vm15 = vcmask 261120
    %16 = vst.msk [vmem:[#allocation2] sm:$0xff] %vm15, 0.0
    %17 = vst.msk [vmem:[#allocation2 + $0x8] sm:$0xff] %vm15, 0.0
  $region13: #{decoder_layer.25} parent=0 // pred_fallthru
    _
  %v18 = vld [vmem:[#allocation2] sm:$0xff]
  %v19 = vld [vmem:[#allocation2 + $0x8] sm:$0xff]
  %v20 = vld [vmem:[%s0] sm:$0xff]
  %v21 = vld [vmem:[%s0 + $0x8] sm:$0xff]
  %v22 = vld [vmem:[%s1] sm:$0xff]
  %v23 = vld [vmem:[%s1 + $0x8] sm:$0xff]
  %v24 = vld [vmem:[%s1 + $0x10] sm:$0xff]
  %v25 = vld [vmem:[%s1 + $0x18] sm:$0xff]
  %vm26 = vcmask 261120
  %v28 = vsel %vm26, %v20, 0
  %v31 = vsel %vm26, %v21, 0
  %33 = vmatprep.subr.mxu0 0.0
  %34 = vmatpush1.msra.mxu0 0.0
  %35 = vmatprep.subr.mxu0 0.0
  %36 = vmatpush1.msra.mxu0 0.0
  %37 = vmatprep.subr.mxu0 0.0
  %38 = vmatpush1.msra.mxu0 0.0
  %39 = vmatprep.subr.mxu0 0.0
  %40 = vmatpush1.msra.mxu0 0.0
  %41 = vmatprep.subr.mxu0 0.0
  %42 = vmatpush1.msra.mxu0 0.0
  %43 = vmatprep.subr.mxu0 0.0
  %44 = vmatpush1.msra.mxu0 0.0
  %45 = vmatprep.subr.mxu0 0.0
  %46 = vmatpush1.msra.mxu0 0.0
  %47 = vmatprep.subr.mxu0 0.0
  %48 = vmatpush1.msra.mxu0 0.0
  %49 = vmatprep.subr.mxu0 0.0
  %50 = vmatpush1.msra.mxu0 0.0
  %51 = vmatprep.subr.mxu0 0.0
  %52 = vmatpush1.msra.mxu0 0.0
  %53 = vmatprep.subr.mxu0 0.0
  %54 = vmatpush1.msra.mxu0 0.0
  %55 = vmatprep.subr.mxu0 0.0
  %56 = vmatpush1.msra.mxu0 0.0
  %57 = vmatprep.subr.mxu0 0.0
  %58 = vmatpush1.msra.mxu0 %v25
  %59 = vmatprep.subr.mxu0 0.0
  %60 = vmatpush1.msra.mxu0 %v24
  %61 = vmatprep.subr.mxu0 0.0
  %62 = vmatpush1.msra.mxu0 %v23
  %63 = vmatprep.subr.mxu0 0.0
  %64 = vmatpush1.msra.mxu0 %v22
  %65 = vmatprep.subr.mxu0 0.0
  %66 = vmatpush2.msra.mxu0 0.0
  %67 = vmatprep.subr.mxu0 0.0
  %68 = vmatpush2.msra.mxu0 0.0
  %69 = vmatprep.subr.mxu0 0.0
  %70 = vmatpush2.msra.mxu0 0.0
  %71 = vmatprep.subr.mxu0 0.0
  %72 = vmatpush2.msra.mxu0 0.0
  %73 = vmatprep.subr.mxu0 0.0
  %74 = vmatpush2.msra.mxu0 0.0
  %75 = vmatprep.subr.mxu0 0.0
  %76 = vmatpush2.msra.mxu0 0.0
  %77 = vmatprep.subr.mxu0 0.0
  %78 = vmatpush2.msra.mxu0 0.0
  %79 = vmatprep.subr.mxu0 0.0
  %80 = vmatpush2.msra.mxu0 0.0
  %81 = vmatprep.subr.mxu0 0.0
  %82 = vmatpush2.msra.mxu0 0.0
  %83 = vmatprep.subr.mxu0 0.0
  %84 = vmatpush2.msra.mxu0 0.0
  %85 = vmatprep.subr.mxu0 0.0
  %86 = vmatpush2.msra.mxu0 0.0
  %87 = vmatprep.subr.mxu0 0.0
  %88 = vmatpush2.msra.mxu0 0.0
  %89 = vmatprep.subr.mxu0 0.0
  %90 = vmatpush2.msra.mxu0 0.0
  %91 = vmatprep.subr.mxu0 0.0
  %92 = vmatpush2.msra.mxu0 0.0
  %93 = vmatprep.subr.mxu0 0.0
  %94 = vmatpush2.msra.mxu0 0.0
  %95 = vmatprep.subr.mxu0 0.0
  %96 = vmatpush2.msra.mxu0 0.0
  %97 = vmatprep.mubr.f32.mxu0 0.0
  %98 = vmatmul.mubr.f32.gmra.mxu0 %v28
  %v99 = vpop.f32.mrf.mxu0
  %v100 = vadd.f32 0.0, %v99
  %v101 = vpop.f32.mrf.mxu0
  %102 = vmatprep.mubr.f32.mxu0 0.0
  %103 = vmatmul.mubr.f32.gmra.mxu0 %v31
  %v104 = vpop.f32.mrf.mxu0
  %v105 = vadd.f32 0.0, %v104
  %v106 = vpop.f32.mrf.mxu0
  %107 = vdwg.mxu0
  %v108 = vadd.f32 %v18, %v100
  %v109 = vadd.f32 %v19, %v105
  %110 = vst.msk [vmem:[#allocation2] sm:$0xff] %vm26, %v108
  %111 = vst.msk [vmem:[#allocation2 + $0x8] sm:$0xff] %vm26, %v109
  // Predicated region
  $region14: #{decoder_layer.25} parent=0 // pred_check
    %p112 = pneg %p11
  $region15: #{decoder_layer.25} parent=0 // pred_check_branch
    %114 = sbr.rel (%p112) target = $region17
  $region16: #{decoder_layer.25} parent=0 // pred_region
    %v115 = vld [vmem:[#allocation2] sm:$0xff]
    %v116 = vld [vmem:[#allocation2 + $0x8] sm:$0xff]
    %117 = vst.msk [vmem:[%s2] sm:$0xff] %vm26, %v115
    %118 = vst.msk [vmem:[%s2 + $0x8] sm:$0xff] %vm26, %v116
  $region17: #{decoder_layer.25} parent=0 // pred_fallthru
    _
  // Predicated region
  $region18: #{decoder_layer.25} parent=0 // pred_check
    _
  $region19: #{decoder_layer.25} parent=0 // pred_check_branch
    %120 = sbr.rel (0) target = $region21
  $region20: #{decoder_layer.25} parent=0 // pred_region
    _
  $region21: #{decoder_layer.25} parent=0 // pred_fallthru
    _
  // Predicated region
  $region22: #{decoder_layer.25} parent=0 // pred_check
    _
  $region23: #{decoder_layer.25} parent=0 // pred_check_branch
    %122 = sbr.rel (0) target = $region25
  $region24: #{decoder_layer.25} parent=0 // pred_region
    _
  $region25: #{decoder_layer.25} parent=0 // pred_fallthru
    _

// kernel: decoder_layer.28
$region0: #{decoder_layer.28}
  #allocation0 [shape = 'u32[]', space=smem, size = 0x4, offset = 0x4, fixed_abs, tag = 'smem constant byte address 0x4 - core index']
  #allocation1 [shape = 'u32[144,128]{1,0:T(1,128)}', space=vmem, size = 0x12000, scoped, tag = 'internal scratch']
  #allocation2 [shape = 'f32[16,3]{1,0:T(8,128)}', space=vmem, size = 0x2000, scoped, tag = 'scratch operand']
  %s0 = inlined_call_operand.vmem [shape: f32[16,32], index: 0, kind: input, shape index: {}]
  %s1 = inlined_call_operand.vmem [shape: f32[32,3], index: 1, kind: input, shape index: {}]
  %s2 = inlined_call_operand.vmem [shape: f32[16,3], index: 2, kind: output, shape index: {}]
  %s3 = sld [smem:[#allocation0]]
  $region26: #{decoder_layer.28} parent=0
    _
  %s5 = ssub.s32 1, %s3
  %s6 = scalar_select 0, %s5, %s3
  // Predicated region
  $region2: #{decoder_layer.28} parent=0 // pred_check
    _
  $region3: #{decoder_layer.28} parent=0 // pred_check_branch
    %8 = sbr.rel (0) target = $region5
  $region4: #{decoder_layer.28} parent=0 // pred_region
    _
  $region5: #{decoder_layer.28} parent=0 // pred_fallthru
    _
  // Predicated region
  $region6: #{decoder_layer.28} parent=0 // pred_check
    _
  $region7: #{decoder_layer.28} parent=0 // pred_check_branch
    %10 = sbr.rel (0) target = $region9
  $region8: #{decoder_layer.28} parent=0 // pred_region
    _
  $region9: #{decoder_layer.28} parent=0 // pred_fallthru
    _
  %p11 = scmp.eq.s32.totalorder 0, 0
  // Predicated region
  $region10: #{decoder_layer.28} parent=0 // pred_check
    %p12 = pneg %p11
  $region11: #{decoder_layer.28} parent=0 // pred_check_branch
    %14 = sbr.rel (%p12) target = $region13
  $region12: #{decoder_layer.28} parent=0 // pred_region
    %vm15 = vcmask 23552
    %16 = vst.msk [vmem:[#allocation2] sm:$0xff] %vm15, 0.0
    %17 = vst.msk [vmem:[#allocation2 + $0x8] sm:$0xff] %vm15, 0.0
  $region13: #{decoder_layer.28} parent=0 // pred_fallthru
    _
  %v18 = vld [vmem:[#allocation2] sm:$0xff]
  %v19 = vld [vmem:[#allocation2 + $0x8] sm:$0xff]
  %v20 = vld [vmem:[%s0] sm:$0xff]
  %v21 = vld [vmem:[%s0 + $0x8] sm:$0xff]
  %v22 = vld [vmem:[%s1] sm:$0xff]
  %v23 = vld [vmem:[%s1 + $0x8] sm:$0xff]
  %v24 = vld [vmem:[%s1 + $0x10] sm:$0xff]
  %v25 = vld [vmem:[%s1 + $0x18] sm:$0xff]
  %vm26 = vcmask 261120
  %v28 = vsel %vm26, %v20, 0
  %v31 = vsel %vm26, %v21, 0
  %33 = vmatprep.subr.mxu0 0.0
  %34 = vmatpush1.msra.mxu0 0.0
  %35 = vmatprep.subr.mxu0 0.0
  %36 = vmatpush1.msra.mxu0 0.0
  %37 = vmatprep.subr.mxu0 0.0
  %38 = vmatpush1.msra.mxu0 0.0
  %39 = vmatprep.subr.mxu0 0.0
  %40 = vmatpush1.msra.mxu0 0.0
  %41 = vmatprep.subr.mxu0 0.0
  %42 = vmatpush1.msra.mxu0 0.0
  %43 = vmatprep.subr.mxu0 0.0
  %44 = vmatpush1.msra.mxu0 0.0
  %45 = vmatprep.subr.mxu0 0.0
  %46 = vmatpush1.msra.mxu0 0.0
  %47 = vmatprep.subr.mxu0 0.0
  %48 = vmatpush1.msra.mxu0 0.0
  %49 = vmatprep.subr.mxu0 0.0
  %50 = vmatpush1.msra.mxu0 0.0
  %51 = vmatprep.subr.mxu0 0.0
  %52 = vmatpush1.msra.mxu0 0.0
  %53 = vmatprep.subr.mxu0 0.0
  %54 = vmatpush1.msra.mxu0 0.0
  %55 = vmatprep.subr.mxu0 0.0
  %56 = vmatpush1.msra.mxu0 0.0
  %57 = vmatprep.subr.mxu0 0.0
  %58 = vmatpush1.msra.mxu0 %v25
  %59 = vmatprep.subr.mxu0 0.0
  %60 = vmatpush1.msra.mxu0 %v24
  %61 = vmatprep.subr.mxu0 0.0
  %62 = vmatpush1.msra.mxu0 %v23
  %63 = vmatprep.subr.mxu0 0.0
  %64 = vmatpush1.msra.mxu0 %v22
  %65 = vmatprep.subr.mxu0 0.0
  %66 = vmatpush2.msra.mxu0 0.0
  %67 = vmatprep.subr.mxu0 0.0
  %68 = vmatpush2.msra.mxu0 0.0
  %69 = vmatprep.subr.mxu0 0.0
  %70 = vmatpush2.msra.mxu0 0.0
  %71 = vmatprep.subr.mxu0 0.0
  %72 = vmatpush2.msra.mxu0 0.0
  %73 = vmatprep.subr.mxu0 0.0
  %74 = vmatpush2.msra.mxu0 0.0
  %75 = vmatprep.subr.mxu0 0.0
  %76 = vmatpush2.msra.mxu0 0.0
  %77 = vmatprep.subr.mxu0 0.0
  %78 = vmatpush2.msra.mxu0 0.0
  %79 = vmatprep.subr.mxu0 0.0
  %80 = vmatpush2.msra.mxu0 0.0
  %81 = vmatprep.subr.mxu0 0.0
  %82 = vmatpush2.msra.mxu0 0.0
  %83 = vmatprep.subr.mxu0 0.0
  %84 = vmatpush2.msra.mxu0 0.0
  %85 = vmatprep.subr.mxu0 0.0
  %86 = vmatpush2.msra.mxu0 0.0
  %87 = vmatprep.subr.mxu0 0.0
  %88 = vmatpush2.msra.mxu0 0.0
  %89 = vmatprep.subr.mxu0 0.0
  %90 = vmatpush2.msra.mxu0 0.0
  %91 = vmatprep.subr.mxu0 0.0
  %92 = vmatpush2.msra.mxu0 0.0
  %93 = vmatprep.subr.mxu0 0.0
  %94 = vmatpush2.msra.mxu0 0.0
  %95 = vmatprep.subr.mxu0 0.0
  %96 = vmatpush2.msra.mxu0 0.0
  %97 = vmatprep.mubr.f32.mxu0 0.0
  %98 = vmatmul.mubr.f32.gmra.mxu0 %v28
  %v99 = vpop.f32.mrf.mxu0
  %v100 = vadd.f32 0.0, %v99
  %v101 = vpop.f32.mrf.mxu0
  %102 = vmatprep.mubr.f32.mxu0 0.0
  %103 = vmatmul.mubr.f32.gmra.mxu0 %v31
  %v104 = vpop.f32.mrf.mxu0
  %v105 = vadd.f32 0.0, %v104
  %v106 = vpop.f32.mrf.mxu0
  %107 = vdwg.mxu0
  %v108 = vadd.f32 %v18, %v100
  %v109 = vadd.f32 %v19, %v105
  %vm110 = vcmask 23552
  %111 = vst.msk [vmem:[#allocation2] sm:$0xff] %vm110, %v108
  %112 = vst.msk [vmem:[#allocation2 + $0x8] sm:$0xff] %vm110, %v109
  // Predicated region
  $region14: #{decoder_layer.28} parent=0 // pred_check
    %p113 = pneg %p11
  $region15: #{decoder_layer.28} parent=0 // pred_check_branch
    %115 = sbr.rel (%p113) target = $region17
  $region16: #{decoder_layer.28} parent=0 // pred_region
    %v116 = vld [vmem:[#allocation2] sm:$0xff]
    %v117 = vld [vmem:[#allocation2 + $0x8] sm:$0xff]
    %118 = vst.msk [vmem:[%s2] sm:$0xff] %vm110, %v116
    %119 = vst.msk [vmem:[%s2 + $0x8] sm:$0xff] %vm110, %v117
  $region17: #{decoder_layer.28} parent=0 // pred_fallthru
    _
  // Predicated region
  $region18: #{decoder_layer.28} parent=0 // pred_check
    _
  $region19: #{decoder_layer.28} parent=0 // pred_check_branch
    %121 = sbr.rel (0) target = $region21
  $region20: #{decoder_layer.28} parent=0 // pred_region
    _
  $region21: #{decoder_layer.28} parent=0 // pred_fallthru
    _
  // Predicated region
  $region22: #{decoder_layer.28} parent=0 // pred_check
    _
  $region23: #{decoder_layer.28} parent=0 // pred_check_branch
    %123 = sbr.rel (0) target = $region25
  $region24: #{decoder_layer.28} parent=0 // pred_region
    _
  $region25: #{decoder_layer.28} parent=0 // pred_fallthru
    _

// kernel: decoder_layer.27
$region0: #{decoder_layer.27}
  #allocation0 [shape = 'u32[]', space=smem, size = 0x4, offset = 0x4, fixed_abs, tag = 'smem constant byte address 0x4 - core index']
  #allocation1 [shape = 'u32[144,128]{1,0:T(1,128)}', space=vmem, size = 0x12000, scoped, tag = 'internal scratch']
  %s0 = inlined_call_operand.vmem [shape: f32[16,32], index: 0, kind: input, shape index: {}]
  %s1 = inlined_call_operand.vmem [shape: f32[32,64], index: 1, kind: input, shape index: {}]
  %s2 = inlined_call_operand.vmem [shape: f32[32,64], index: 2, kind: input, shape index: {}]
  %s3 = inlined_call_operand.vmem [shape: f32[64,32], index: 3, kind: input, shape index: {}]
  %s4 = inlined_call_operand.vmem [shape: f32[16,32], index: 4, kind: output, shape index: {}]
  %s5 = sld [smem:[#allocation0]]
  $region26: #{decoder_layer.27} parent=0
    _
  %s7 = ssub.s32 1, %s5
  %s8 = scalar_select 0, %s7, %s5
  // Predicated region
  $region2: #{decoder_layer.27} parent=0 // pred_check
    _
  $region3: #{decoder_layer.27} parent=0 // pred_check_branch
    %10 = sbr.rel (0) target = $region5
  $region4: #{decoder_layer.27} parent=0 // pred_region
    _
  $region5: #{decoder_layer.27} parent=0 // pred_fallthru
    _
  // Predicated region
  $region6: #{decoder_layer.27} parent=0 // pred_check
    _
  $region7: #{decoder_layer.27} parent=0 // pred_check_branch
    %12 = sbr.rel (0) target = $region9
  $region8: #{decoder_layer.27} parent=0 // pred_region
    _
  $region9: #{decoder_layer.27} parent=0 // pred_fallthru
    _
  // Predicated region
  $region10: #{decoder_layer.27} parent=0 // pred_check
    _
  $region11: #{decoder_layer.27} parent=0 // pred_check_branch
    %14 = sbr.rel (0) target = $region13
  $region12: #{decoder_layer.27} parent=0 // pred_region
    _
  $region13: #{decoder_layer.27} parent=0 // pred_fallthru
    _
  // Predicated region
  $region14: #{decoder_layer.27} parent=0 // pred_check
    _
  $region15: #{decoder_layer.27} parent=0 // pred_check_branch
    %16 = sbr.rel (0) target = $region17
  $region16: #{decoder_layer.27} parent=0 // pred_region
    _
  $region17: #{decoder_layer.27} parent=0 // pred_fallthru
    _
  %v17 = vld [vmem:[%s0] sm:$0xff]
  %v18 = vld [vmem:[%s0 + $0x8] sm:$0xff]
  %v19 = vld [vmem:[%s1] sm:$0xff]
  %v20 = vld [vmem:[%s1 + $0x8] sm:$0xff]
  %v21 = vld [vmem:[%s1 + $0x10] sm:$0xff]
  %v22 = vld [vmem:[%s1 + $0x18] sm:$0xff]
  %vm23 = vcmask 261120
  %v25 = vsel %vm23, %v17, 0
  %v28 = vsel %vm23, %v18, 0
  %30 = vmatprep.subr.mxu0 0.0
  %31 = vmatpush1.msra.mxu0 0.0
  %32 = vmatprep.subr.mxu0 0.0
  %33 = vmatpush1.msra.mxu0 0.0
  %34 = vmatprep.subr.mxu0 0.0
  %35 = vmatpush1.msra.mxu0 0.0
  %36 = vmatprep.subr.mxu0 0.0
  %37 = vmatpush1.msra.mxu0 0.0
  %38 = vmatprep.subr.mxu0 0.0
  %39 = vmatpush1.msra.mxu0 0.0
  %40 = vmatprep.subr.mxu0 0.0
  %41 = vmatpush1.msra.mxu0 0.0
  %42 = vmatprep.subr.mxu0 0.0
  %43 = vmatpush1.msra.mxu0 0.0
  %44 = vmatprep.subr.mxu0 0.0
  %45 = vmatpush1.msra.mxu0 0.0
  %46 = vmatprep.subr.mxu0 0.0
  %47 = vmatpush1.msra.mxu0 0.0
  %48 = vmatprep.subr.mxu0 0.0
  %49 = vmatpush1.msra.mxu0 0.0
  %50 = vmatprep.subr.mxu0 0.0
  %51 = vmatpush1.msra.mxu0 0.0
  %52 = vmatprep.subr.mxu0 0.0
  %53 = vmatpush1.msra.mxu0 0.0
  %54 = vmatprep.subr.mxu0 0.0
  %55 = vmatpush1.msra.mxu0 %v22
  %56 = vmatprep.subr.mxu0 0.0
  %57 = vmatpush1.msra.mxu0 %v21
  %58 = vmatprep.subr.mxu0 0.0
  %59 = vmatpush1.msra.mxu0 %v20
  %60 = vmatprep.subr.mxu0 0.0
  %61 = vmatpush1.msra.mxu0 %v19
  %62 = vmatprep.subr.mxu0 0.0
  %63 = vmatpush2.msra.mxu0 0.0
  %64 = vmatprep.subr.mxu0 0.0
  %65 = vmatpush2.msra.mxu0 0.0
  %66 = vmatprep.subr.mxu0 0.0
  %67 = vmatpush2.msra.mxu0 0.0
  %68 = vmatprep.subr.mxu0 0.0
  %69 = vmatpush2.msra.mxu0 0.0
  %70 = vmatprep.subr.mxu0 0.0
  %71 = vmatpush2.msra.mxu0 0.0
  %72 = vmatprep.subr.mxu0 0.0
  %73 = vmatpush2.msra.mxu0 0.0
  %74 = vmatprep.subr.mxu0 0.0
  %75 = vmatpush2.msra.mxu0 0.0
  %76 = vmatprep.subr.mxu0 0.0
  %77 = vmatpush2.msra.mxu0 0.0
  %78 = vmatprep.subr.mxu0 0.0
  %79 = vmatpush2.msra.mxu0 0.0
  %80 = vmatprep.subr.mxu0 0.0
  %81 = vmatpush2.msra.mxu0 0.0
  %82 = vmatprep.subr.mxu0 0.0
  %83 = vmatpush2.msra.mxu0 0.0
  %84 = vmatprep.subr.mxu0 0.0
  %85 = vmatpush2.msra.mxu0 0.0
  %86 = vmatprep.subr.mxu0 0.0
  %87 = vmatpush2.msra.mxu0 0.0
  %88 = vmatprep.subr.mxu0 0.0
  %89 = vmatpush2.msra.mxu0 0.0
  %90 = vmatprep.subr.mxu0 0.0
  %91 = vmatpush2.msra.mxu0 0.0
  %92 = vmatprep.subr.mxu0 0.0
  %93 = vmatpush2.msra.mxu0 0.0
  %94 = vmatprep.mubr.f32.mxu0 0.0
  %95 = vmatmul.mubr.f32.gmra.mxu0 %v25
  %v96 = vpop.f32.mrf.mxu0
  %v97 = vadd.f32 0.0, %v96
  %v98 = vpop.f32.mrf.mxu0
  %99 = vmatprep.mubr.f32.mxu0 0.0
  %100 = vmatmul.mubr.f32.gmra.mxu0 %v28
  %v101 = vpop.f32.mrf.mxu0
  %v102 = vadd.f32 0.0, %v101
  %v103 = vpop.f32.mrf.mxu0
  %104 = vdwg.mxu0
  %v105 = vld [vmem:[%s2] sm:$0xff]
  %v106 = vld [vmem:[%s2 + $0x8] sm:$0xff]
  %v107 = vld [vmem:[%s2 + $0x10] sm:$0xff]
  %v108 = vld [vmem:[%s2 + $0x18] sm:$0xff]
  %109 = vmatprep.subr.mxu0 0.0
  %110 = vmatpush1.msra.mxu0 0.0
  %111 = vmatprep.subr.mxu0 0.0
  %112 = vmatpush1.msra.mxu0 0.0
  %113 = vmatprep.subr.mxu0 0.0
  %114 = vmatpush1.msra.mxu0 0.0
  %115 = vmatprep.subr.mxu0 0.0
  %116 = vmatpush1.msra.mxu0 0.0
  %117 = vmatprep.subr.mxu0 0.0
  %118 = vmatpush1.msra.mxu0 0.0
  %119 = vmatprep.subr.mxu0 0.0
  %120 = vmatpush1.msra.mxu0 0.0
  %121 = vmatprep.subr.mxu0 0.0
  %122 = vmatpush1.msra.mxu0 0.0
  %123 = vmatprep.subr.mxu0 0.0
  %124 = vmatpush1.msra.mxu0 0.0
  %125 = vmatprep.subr.mxu0 0.0
  %126 = vmatpush1.msra.mxu0 0.0
  %127 = vmatprep.subr.mxu0 0.0
  %128 = vmatpush1.msra.mxu0 0.0
  %129 = vmatprep.subr.mxu0 0.0
  %130 = vmatpush1.msra.mxu0 0.0
  %131 = vmatprep.subr.mxu0 0.0
  %132 = vmatpush1.msra.mxu0 0.0
  %133 = vmatprep.subr.mxu0 0.0
  %134 = vmatpush1.msra.mxu0 %v108
  %135 = vmatprep.subr.mxu0 0.0
  %136 = vmatpush1.msra.mxu0 %v107
  %137 = vmatprep.subr.mxu0 0.0
  %138 = vmatpush1.msra.mxu0 %v106
  %139 = vmatprep.subr.mxu0 0.0
  %140 = vmatpush1.msra.mxu0 %v105
  %141 = vmatprep.subr.mxu0 0.0
  %142 = vmatpush2.msra.mxu0 0.0
  %143 = vmatprep.subr.mxu0 0.0
  %144 = vmatpush2.msra.mxu0 0.0
  %145 = vmatprep.subr.mxu0 0.0
  %146 = vmatpush2.msra.mxu0 0.0
  %147 = vmatprep.subr.mxu0 0.0
  %148 = vmatpush2.msra.mxu0 0.0
  %149 = vmatprep.subr.mxu0 0.0
  %150 = vmatpush2.msra.mxu0 0.0
  %151 = vmatprep.subr.mxu0 0.0
  %152 = vmatpush2.msra.mxu0 0.0
  %153 = vmatprep.subr.mxu0 0.0
  %154 = vmatpush2.msra.mxu0 0.0
  %155 = vmatprep.subr.mxu0 0.0
  %156 = vmatpush2.msra.mxu0 0.0
  %157 = vmatprep.subr.mxu0 0.0
  %158 = vmatpush2.msra.mxu0 0.0
  %159 = vmatprep.subr.mxu0 0.0
  %160 = vmatpush2.msra.mxu0 0.0
  %161 = vmatprep.subr.mxu0 0.0
  %162 = vmatpush2.msra.mxu0 0.0
  %163 = vmatprep.subr.mxu0 0.0
  %164 = vmatpush2.msra.mxu0 0.0
  %165 = vmatprep.subr.mxu0 0.0
  %166 = vmatpush2.msra.mxu0 0.0
  %167 = vmatprep.subr.mxu0 0.0
  %168 = vmatpush2.msra.mxu0 0.0
  %169 = vmatprep.subr.mxu0 0.0
  %170 = vmatpush2.msra.mxu0 0.0
  %171 = vmatprep.subr.mxu0 0.0
  %172 = vmatpush2.msra.mxu0 0.0
  %173 = vmatprep.mubr.f32.mxu0 0.0
  %174 = vmatmul.mubr.f32.gmra.mxu0 %v25
  %v175 = vpop.f32.mrf.mxu0
  %v176 = vadd.f32 0.0, %v175
  %v177 = vpop.f32.mrf.mxu0
  %178 = vmatprep.mubr.f32.mxu0 0.0
  %179 = vmatmul.mubr.f32.gmra.mxu0 %v28
  %v180 = vpop.f32.mrf.mxu0
  %v181 = vadd.f32 0.0, %v180
  %v182 = vpop.f32.mrf.mxu0
  %183 = vdwg.mxu0
  %v184 = vsub.f32 0.0, %v97
  %v185 = vsub.f32 0.0, %v102
  %v186 = vmul.f32 %v184, 1.442695
  %v187 = vpow.pop %v186
  %v188 = vmul.f32 %v185, 1.442695
  %v189 = vpow.pop %v188
  %v190 = vadd.f32 %v187, 1.0
  %v191 = vadd.f32 %v189, 1.0
  %v192 = vrcp.pop %v190
  %v193 = vmul.f32 1.0, %v192
  %v194 = vrcp.pop %v191
  %v195 = vmul.f32 1.0, %v194
  %v196 = vmul.f32 %v97, %v193
  %v197 = vmul.f32 %v102, %v195
  %v198 = vmul.f32 %v196, %v176
  %v199 = vmul.f32 %v197, %v181
  %v200 = vld [vmem:[%s3] sm:$0xff]
  %v201 = vld [vmem:[%s3 + $0x8] sm:$0xff]
  %v202 = vld [vmem:[%s3 + $0x10] sm:$0xff]
  %v203 = vld [vmem:[%s3 + $0x18] sm:$0xff]
  %v204 = vld [vmem:[%s3 + $0x20] sm:$0xff]
  %v205 = vld [vmem:[%s3 + $0x28] sm:$0xff]
  %v206 = vld [vmem:[%s3 + $0x30] sm:$0xff]
  %v207 = vld [vmem:[%s3 + $0x38] sm:$0xff]
  %vm208 = vcmask 523264
  %v210 = vsel %vm208, %v198, 0
  %v213 = vsel %vm208, %v199, 0
  %215 = vmatprep.subr.mxu0 0.0
  %216 = vmatpush1.msra.mxu0 0.0
  %217 = vmatprep.subr.mxu0 0.0
  %218 = vmatpush1.msra.mxu0 0.0
  %219 = vmatprep.subr.mxu0 0.0
  %220 = vmatpush1.msra.mxu0 0.0
  %221 = vmatprep.subr.mxu0 0.0
  %222 = vmatpush1.msra.mxu0 0.0
  %223 = vmatprep.subr.mxu0 0.0
  %224 = vmatpush1.msra.mxu0 0.0
  %225 = vmatprep.subr.mxu0 0.0
  %226 = vmatpush1.msra.mxu0 0.0
  %227 = vmatprep.subr.mxu0 0.0
  %228 = vmatpush1.msra.mxu0 0.0
  %229 = vmatprep.subr.mxu0 0.0
  %230 = vmatpush1.msra.mxu0 0.0
  %231 = vmatprep.subr.mxu0 0.0
  %232 = vmatpush1.msra.mxu0 %v207
  %233 = vmatprep.subr.mxu0 0.0
  %234 = vmatpush1.msra.mxu0 %v206
  %235 = vmatprep.subr.mxu0 0.0
  %236 = vmatpush1.msra.mxu0 %v205
  %237 = vmatprep.subr.mxu0 0.0
  %238 = vmatpush1.msra.mxu0 %v204
  %239 = vmatprep.subr.mxu0 0.0
  %240 = vmatpush1.msra.mxu0 %v203
  %241 = vmatprep.subr.mxu0 0.0
  %242 = vmatpush1.msra.mxu0 %v202
  %243 = vmatprep.subr.mxu0 0.0
  %244 = vmatpush1.msra.mxu0 %v201
  %245 = vmatprep.subr.mxu0 0.0
  %246 = vmatpush1.msra.mxu0 %v200
  %247 = vmatprep.subr.mxu0 0.0
  %248 = vmatpush2.msra.mxu0 0.0
  %249 = vmatprep.subr.mxu0 0.0
  %250 = vmatpush2.msra.mxu0 0.0
  %251 = vmatprep.subr.mxu0 0.0
  %252 = vmatpush2.msra.mxu0 0.0
  %253 = vmatprep.subr.mxu0 0.0
  %254 = vmatpush2.msra.mxu0 0.0
  %255 = vmatprep.subr.mxu0 0.0
  %256 = vmatpush2.msra.mxu0 0.0
  %257 = vmatprep.subr.mxu0 0.0
  %258 = vmatpush2.msra.mxu0 0.0
  %259 = vmatprep.subr.mxu0 0.0
  %260 = vmatpush2.msra.mxu0 0.0
  %261 = vmatprep.subr.mxu0 0.0
  %262 = vmatpush2.msra.mxu0 0.0
  %263 = vmatprep.subr.mxu0 0.0
  %264 = vmatpush2.msra.mxu0 0.0
  %265 = vmatprep.subr.mxu0 0.0
  %266 = vmatpush2.msra.mxu0 0.0
  %267 = vmatprep.subr.mxu0 0.0
  %268 = vmatpush2.msra.mxu0 0.0
  %269 = vmatprep.subr.mxu0 0.0
  %270 = vmatpush2.msra.mxu0 0.0
  %271 = vmatprep.subr.mxu0 0.0
  %272 = vmatpush2.msra.mxu0 0.0
  %273 = vmatprep.subr.mxu0 0.0
  %274 = vmatpush2.msra.mxu0 0.0
  %275 = vmatprep.subr.mxu0 0.0
  %276 = vmatpush2.msra.mxu0 0.0
  %277 = vmatprep.subr.mxu0 0.0
  %278 = vmatpush2.msra.mxu0 0.0
  %279 = vmatprep.mubr.f32.mxu0 0.0
  %280 = vmatmul.mubr.f32.gmra.mxu0 %v210
  %v281 = vpop.f32.mrf.mxu0
  %v282 = vadd.f32 0.0, %v281
  %v283 = vpop.f32.mrf.mxu0
  %284 = vmatprep.mubr.f32.mxu0 0.0
  %285 = vmatmul.mubr.f32.gmra.mxu0 %v213
  %v286 = vpop.f32.mrf.mxu0
  %v287 = vadd.f32 0.0, %v286
  %v288 = vpop.f32.mrf.mxu0
  %289 = vdwg.mxu0
  %290 = vst.msk [vmem:[%s4] sm:$0xff] %vm23, %v282
  %291 = vst.msk [vmem:[%s4 + $0x8] sm:$0xff] %vm23, %v287
  // Predicated region
  $region18: #{decoder_layer.27} parent=0 // pred_check
    _
  $region19: #{decoder_layer.27} parent=0 // pred_check_branch
    %293 = sbr.rel (0) target = $region21
  $region20: #{decoder_layer.27} parent=0 // pred_region
    _
  $region21: #{decoder_layer.27} parent=0 // pred_fallthru
    _
  // Predicated region
  $region22: #{decoder_layer.27} parent=0 // pred_check
    _
  $region23: #{decoder_layer.27} parent=0 // pred_check_branch
    %295 = sbr.rel (0) target = $region25
  $region24: #{decoder_layer.27} parent=0 // pred_region
    _
  $region25: #{decoder_layer.27} parent=0 // pred_fallthru
    _

</llo_original>
